<compile_context>
chip_gen: v7x
topology: tpu7x:2x2x1
jax: 0.10.0
libtpu: 0.0.40
codegen_flags: <defaults>
</compile_context>

<pallas_src>
import math

import jax
import jax.numpy as jnp
from jax.experimental import pallas as pl
from jax.experimental.pallas import tpu as pltpu


def mf_kernel(u_idx_ref, i_idx_ref, u_table_ref, i_table_ref, o_ref):
    # u_idx_ref, i_idx_ref : (1, TB) int32   -- this tile's user/item indices (lanes)
    # u_table_ref          : (D, n_users) f32 -- whole user table, VMEM resident
    # i_table_ref          : (D, n_items) f32 -- whole item table, VMEM resident
    # o_ref                : (1, TB) f32      -- scores for this batch tile
    n_users = u_table_ref.shape[1]
    n_items = i_table_ref.shape[1]
    tb = o_ref.shape[1]

    one = jnp.float32(1.0)
    zero = jnp.float32(0.0)

    # One-hot selection matrices, (N, TB): column b selects row idx[b].
    u_iota = jax.lax.broadcasted_iota(jnp.int32, (n_users, tb), 0)
    i_iota = jax.lax.broadcasted_iota(jnp.int32, (n_items, tb), 0)
    u_onehot = jnp.where(u_iota == u_idx_ref[...], one, zero)
    i_onehot = jnp.where(i_iota == i_idx_ref[...], one, zero)

    # Gather TB embedding rows per table via MXU matmul -> (D, TB) lane-dense.
    u_g = jnp.dot(u_table_ref[...], u_onehot,
                  preferred_element_type=jnp.float32,
                  precision=jax.lax.Precision.HIGHEST)
    i_g = jnp.dot(i_table_ref[...], i_onehot,
                  preferred_element_type=jnp.float32,
                  precision=jax.lax.Precision.HIGHEST)

    # Elementwise multiply on full-width vregs, reduce over embedding dim
    # (sublanes) -> lane-dense (1, TB) result, stored unmasked.
    o_ref[...] = jnp.sum(u_g * i_g, axis=0, keepdims=True)


def mf_forward(user_idx, item_idx, user_emb, item_emb, *, tb=256):
    """user_idx, item_idx: int (B,); user_emb: (n_users, D); item_emb: (n_items, D)."""
    B = user_idx.shape[0]
    n_users, D = user_emb.shape
    n_items = item_emb.shape[0]

    # Pad the batch to a multiple of the tile size (pad indices with 0 -> valid
    # rows; padded scores are sliced off below).
    num_tiles = pl.cdiv(B, tb)
    B_pad = num_tiles * tb
    pad = B_pad - B
    u_idx = jnp.pad(user_idx.astype(jnp.int32), (0, pad)).reshape(1, B_pad)
    i_idx = jnp.pad(item_idx.astype(jnp.int32), (0, pad)).reshape(1, B_pad)

    # (D, N) layout: embedding dim on sublanes, table rows on lanes.
    u_tab_t = user_emb.astype(jnp.float32).T
    i_tab_t = item_emb.astype(jnp.float32).T

    # Rough VMEM budget: resident tables + one-hot temporaries + gathered tiles
    # + double-buffered index/output tiles.  Only raise the scoped limit when
    # actually needed; cap at 48 MiB to leave headroom on v7x (64 MiB physical).
    table_bytes = (n_users + n_items) * D * 4
    onehot_bytes = (n_users + n_items) * tb * 4
    gathered_bytes = 2 * D * tb * 4
    tile_bytes = 2 * 3 * tb * 4
    vmem_needed = table_bytes + onehot_bytes + gathered_bytes + tile_bytes
    vmem_limit = None
    if vmem_needed > (12 << 20):
        vmem_limit = min(vmem_needed + (8 << 20), 48 << 20)

    cost = pl.CostEstimate(
        flops=2 * B_pad * D * (n_users + n_items) + 2 * B_pad * D,
        transcendentals=0,
        bytes_accessed=table_bytes + 2 * B_pad * 4 + B_pad * 4,
    )

    out = pl.pallas_call(
        mf_kernel,
        out_shape=jax.ShapeDtypeStruct((1, B_pad), jnp.float32),
        grid=(num_tiles,),
        in_specs=[
            pl.BlockSpec((1, tb), lambda b: (0, b)),            # user indices tile
            pl.BlockSpec((1, tb), lambda b: (0, b)),            # item indices tile
            pl.BlockSpec((D, n_users), lambda b: (0, 0)),       # whole user table (resident)
            pl.BlockSpec((D, n_items), lambda b: (0, 0)),       # whole item table (resident)
        ],
        out_specs=pl.BlockSpec((1, tb), lambda b: (0, b)),      # lane-dense scores
        compiler_params=pltpu.CompilerParams(
            dimension_semantics=("parallel",),                  # shard batch across TCs (v7x)
            vmem_limit_bytes=vmem_limit,
        ),
        cost_estimate=cost,
    )(u_idx, i_idx, u_tab_t, i_tab_t)

    return out.reshape(B_pad)[:B]   # == score.squeeze()


def kaiming_uniform(key, shape):
    # nn.init.kaiming_uniform_ defaults: a=0, fan_in = shape[1] for 2-D weights
    # -> bound = sqrt(6 / fan_in)
    fan_in = shape[1]
    bound = math.sqrt(6.0 / fan_in)
    return jax.random.uniform(key, shape, jnp.float32, -bound, bound)


if __name__ == "__main__":
    n_users, n_items, embedding_dim = 100, 200, 8
    batch = 300   # not a multiple of the tile size -> exercises padding path

    key = jax.random.PRNGKey(0)
    k_u, k_i, k_ui, k_ii = jax.random.split(key, 4)

    user_emb = kaiming_uniform(k_u, (n_users, embedding_dim))
    item_emb = kaiming_uniform(k_i, (n_items, embedding_dim))
    user_idx = jax.random.randint(k_ui, (batch,), 0, n_users, dtype=jnp.int32)
    item_idx = jax.random.randint(k_ii, (batch,), 0, n_items, dtype=jnp.int32)

    score = mf_forward(user_idx, item_idx, user_emb, item_emb)
    score = jax.block_until_ready(score)

    # pure-JAX reference check
    ref = jnp.sum(user_emb[user_idx] * item_emb[item_idx], axis=1)
    assert score.shape == (batch,), score.shape
    assert jnp.allclose(score, ref, atol=1e-5, rtol=1e-5), (score, ref)

    print("KERNEL_OK")
</pallas_src>

<mosaic_0001>
module attributes {stable_mosaic.version = 11 : i64} {
  func.func @mf_kernel(%arg0: i32, %arg1: memref<1x256xi32, #tpu.memory_space<vmem>>, %arg2: memref<1x256xi32, #tpu.memory_space<vmem>>, %arg3: memref<8x100xf32, #tpu.memory_space<vmem>>, %arg4: memref<8x200xf32, #tpu.memory_space<vmem>>, %arg5: memref<1x256xf32, #tpu.memory_space<vmem>>) attributes {dimension_semantics = [#tpu.dimension_semantics<parallel>], iteration_bounds = array<i64: 2>, scalar_prefetch = 0 : i64, scratch_operands = 0 : i64, tpu.core_type = #tpu.core_type<tc>, window_params = [{transform_indices = @transform_0, window_bounds = array<i64: 1, 256>}, {transform_indices = @transform_1, window_bounds = array<i64: 1, 256>}, {pipeline_mode = #tpu.pipeline_mode<synchronous>, transform_indices = @transform_2, window_bounds = array<i64: 8, 100>}, {pipeline_mode = #tpu.pipeline_mode<synchronous>, transform_indices = @transform_3, window_bounds = array<i64: 8, 200>}, {transform_indices = @transform_4, window_bounds = array<i64: 1, 256>}]} {
    %0 = tpu.iota {dimensions = array<i32: 0>} : vector<100x256xi32>
    %1 = tpu.iota {dimensions = array<i32: 0>} : vector<200x256xi32>
    %c0 = arith.constant 0 : index
    %c0_0 = arith.constant 0 : index
    %2 = vector.load %arg1[%c0, %c0_0] : memref<1x256xi32, #tpu.memory_space<vmem>>, vector<1x256xi32>
    %3 = vector.broadcast %2 : vector<1x256xi32> to vector<100x256xi32>
    %4 = arith.cmpi eq, %0, %3 : vector<100x256xi32>
    %cst = arith.constant 1.000000e+00 : f32
    %cst_1 = arith.constant 0.000000e+00 : f32
    %5 = vector.broadcast %cst : f32 to vector<100x256xf32>
    %6 = vector.broadcast %cst_1 : f32 to vector<100x256xf32>
    %7 = arith.select %4, %5, %6 : vector<100x256xi1>, vector<100x256xf32>
    %c0_2 = arith.constant 0 : index
    %c0_3 = arith.constant 0 : index
    %8 = vector.load %arg2[%c0_2, %c0_3] : memref<1x256xi32, #tpu.memory_space<vmem>>, vector<1x256xi32>
    %9 = vector.broadcast %8 : vector<1x256xi32> to vector<200x256xi32>
    %10 = arith.cmpi eq, %1, %9 : vector<200x256xi32>
    %cst_4 = arith.constant 1.000000e+00 : f32
    %cst_5 = arith.constant 0.000000e+00 : f32
    %11 = vector.broadcast %cst_4 : f32 to vector<200x256xf32>
    %12 = vector.broadcast %cst_5 : f32 to vector<200x256xf32>
    %13 = arith.select %10, %11, %12 : vector<200x256xi1>, vector<200x256xf32>
    %c0_6 = arith.constant 0 : index
    %c0_7 = arith.constant 0 : index
    %14 = vector.load %arg3[%c0_6, %c0_7] : memref<8x100xf32, #tpu.memory_space<vmem>>, vector<8x100xf32>
    %cst_8 = arith.constant dense<0.000000e+00> : vector<8x256xf32>
    %15 = tpu.matmul %14, %7, %cst_8 {dimension_numbers = #tpu.dot_dimension_numbers<[1], [0], [0], [1], [0, 0, 1, 1], [], []>, precision = #tpu.contract_precision<fp32>} : vector<8x100xf32>, vector<100x256xf32>, vector<8x256xf32> -> vector<8x256xf32>
    %c0_9 = arith.constant 0 : index
    %c0_10 = arith.constant 0 : index
    %16 = vector.load %arg4[%c0_9, %c0_10] : memref<8x200xf32, #tpu.memory_space<vmem>>, vector<8x200xf32>
    %cst_11 = arith.constant dense<0.000000e+00> : vector<8x256xf32>
    %17 = tpu.matmul %16, %13, %cst_11 {dimension_numbers = #tpu.dot_dimension_numbers<[1], [0], [0], [1], [0, 0, 1, 1], [], []>, precision = #tpu.contract_precision<fp32>} : vector<8x200xf32>, vector<200x256xf32>, vector<8x256xf32> -> vector<8x256xf32>
    %18 = arith.mulf %15, %17 : vector<8x256xf32>
    %cst_12 = arith.constant dense<0.000000e+00> : vector<256xf32>
    %19 = vector.multi_reduction <add>, %18, %cst_12 [0] : vector<8x256xf32> to vector<256xf32>
    %20 = vector.shape_cast %19 : vector<256xf32> to vector<1x256xf32>
    %c0_13 = arith.constant 0 : index
    %c0_14 = arith.constant 0 : index
    %21 = vector.load %arg5[%c0_13, %c0_14] : memref<1x256xf32, #tpu.memory_space<vmem>>, vector<1x256xf32>
    tpu.vector_store %arg5[%c0_13, %c0_14], %20 {strides = array<i32>} : memref<1x256xf32, #tpu.memory_space<vmem>>, vector<1x256xf32>,
    return
  }
  func.func @transform_0(%arg0: i32) -> (i32, i32) {
    %c0_i32 = arith.constant 0 : i32
    %c0_i32_0 = arith.constant 0 : i32
    return %c0_i32, %arg0 : i32, i32
  }
  func.func @transform_1(%arg0: i32) -> (i32, i32) {
    %c0_i32 = arith.constant 0 : i32
    %c0_i32_0 = arith.constant 0 : i32
    return %c0_i32, %arg0 : i32, i32
  }
  func.func @transform_2(%arg0: i32) -> (i32, i32) {
    %c0_i32 = arith.constant 0 : i32
    %c0_i32_0 = arith.constant 0 : i32
    %c0_i32_1 = arith.constant 0 : i32
    return %c0_i32, %c0_i32_0 : i32, i32
  }
  func.func @transform_3(%arg0: i32) -> (i32, i32) {
    %c0_i32 = arith.constant 0 : i32
    %c0_i32_0 = arith.constant 0 : i32
    %c0_i32_1 = arith.constant 0 : i32
    return %c0_i32, %c0_i32_0 : i32, i32
  }
  func.func @transform_4(%arg0: i32) -> (i32, i32) {
    %c0_i32 = arith.constant 0 : i32
    %c0_i32_0 = arith.constant 0 : i32
    return %c0_i32, %arg0 : i32, i32
  }
}

</mosaic_0001>

<llo_original>
// kernel: tpu_custom_call.1
$region0: #{tpu_custom_call.1}
  #allocation0 [shape = 'u32[]', space=smem, size = 0x4, offset = 0x4, fixed_abs, tag = 'smem constant byte address 0x4 - core index']
  #allocation1 [shape = 'u32[144,128]{1,0:T(1,128)}', space=vmem, size = 0x12000, scoped, tag = 'internal scratch']
  %s0 = inlined_call_operand.hbm [shape: s32[1,512], index: 0, kind: input, shape index: {}]
  %s1 = inlined_call_operand.hbm [shape: s32[1,512], index: 1, kind: input, shape index: {}]
  %s2 = inlined_call_operand.hbm [shape: f32[8,100], index: 2, kind: input, shape index: {}]
  %s3 = inlined_call_operand.hbm [shape: f32[8,200], index: 3, kind: input, shape index: {}]
  %s4 = inlined_call_operand.hbm [shape: f32[1,512], index: 4, kind: output, shape index: {}]
  %s5 = sld [smem:[#allocation0]]
  $region65: #{tpu_custom_call.1} parent=0
    _
  %s7 = ssub.s32 1, %s5
  %s8 = scalar_select 0, %s7, %s5
  $region1: #{tpu_custom_call.1} parent=0
    #allocation2 [shape = 'u8[2048]{0}', space=vmem, size = 0x800, scoped, tag = 'input window, operand 0']
    #allocation3 [shape = 's32[2]{0}', space=sflag, size = 0x8, scoped, tag = 'scoped memory for tpu_custom_call.1']
    #allocation4 [shape = 's32[2]{0}', space=sflag, size = 0x8, scoped, tag = 'scoped memory for tpu_custom_call.1']
    #allocation5 [shape = 'u8[2048]{0}', space=vmem, size = 0x800, scoped, tag = 'input window, operand 1']
    #allocation6 [shape = 's32[2]{0}', space=sflag, size = 0x8, scoped, tag = 'scoped memory for tpu_custom_call.1']
    #allocation7 [shape = 'u8[4096]{0}', space=vmem, size = 0x1000, scoped, tag = 'input window, operand 2, single buffered']
    #allocation8 [shape = 'u8[8192]{0}', space=vmem, size = 0x2000, scoped, tag = 'input window, operand 3, single buffered']
    #allocation9 [shape = 's32[1]{0}', space=sflag, size = 0x4, scoped, tag = 'scoped memory for tpu_custom_call.1']
    #allocation10 [shape = 'u8[2048]{0}', space=vmem, size = 0x800, scoped, tag = 'output window, operand 0']
    %9 = vsyncpa [#allocation3], 0
    %s10 = scalar_lea.sflag [#allocation3], 1
    %11 = vsyncpa %s10, 0
    %12 = vsyncpa [#allocation6], 0
    %s13 = scalar_lea.sflag [#allocation6], 1
    %14 = vsyncpa %s13, 0
    %15 = vsyncpa [#allocation9], 0
    %16 = vsyncpa [#allocation4], 0
    %s17 = scalar_lea.sflag [#allocation4], 1
    %18 = vsyncpa %s17, 0
    loop: start=0, step=1, limit=4
    $region2: #{tpu_custom_call.1} parent=1 // loop_pre_header
      _
    $region3: #{tpu_custom_call.1} parent=1 // loop_header
      %s20 = sphi 0, %s24
      %p21 = scmp.ge.s32.totalorder %s20, 4
      %s30 = sphi 0, %s32
      %s33 = sphi 0, %s30
      %s34 = sphi 0, %s33
      %s50 = sphi 0, %s34
      %s56 = sphi 0, %s58
      %s59 = sphi 0, %s56
      %s60 = sphi 0, %s59
      %s76 = sphi 0, %s60
      %s80 = sphi 0, %s80
      %s82 = sphi 0, %s80
      %s83 = sphi 0, %s82
      %s97 = sphi 0, %s83
      %s101 = sphi 0, %s101
      %s103 = sphi 0, %s101
      %s104 = sphi 0, %s103
      %s118 = sphi 0, %s104
      %s124 = sphi 0, %s126
      %s127 = sphi 0, %s124
      %s128 = sphi 0, %s127
      %s144 = sphi 0, %s128
    $region4: #{tpu_custom_call.1} parent=1 // loop_header_branch
      %23 = sbr.rel (%p21) target = $region8
    $region5: #{tpu_custom_call.1} parent=1 // loop_body
      %s25 = ssub.s32 %s20, 1
      %s26 = ssub.s32 %s20, 2
      %s27 = sadd.s32 %s20, 1
      %s28 = ssub.s32 %s20, %s27
      %p29 = scmp.eq.s32.totalorder %s28, 0
      %s31 = sadd.s32 %s30, 1
      %s32 = scalar_select %p29, %s30, %s31
      %p35 = pneg %p29
      %p36 = scmp.eq.s32.totalorder %s20, 1
      %p37 = por %p35, %p36
      %p38 = scmp.ne.s32.totalorder %s30, %s33
      %p39 = scmp.eq.s32.totalorder %s20, 0
      %p40 = por %p38, %p39
      %p41 = scmp.ne.s32.totalorder %s30, %s33
      %p42 = scmp.eq.s32.totalorder %s25, 1
      %p43 = por %p41, %p42
      %p44 = scmp.ne.s32.totalorder %s33, %s34
      %p45 = scmp.eq.s32.totalorder %s25, 0
      %p46 = por %p44, %p45
      %p47 = scmp.ne.s32.totalorder %s33, %s34
      %p48 = scmp.eq.s32.totalorder %s26, 1
      %p49 = por %p47, %p48
      %p51 = scmp.ne.s32.totalorder %s34, %s50
      %p52 = scmp.eq.s32.totalorder %s26, 0
      %p53 = por %p51, %p52
      %s54 = ssub.s32 %s20, %s27
      %p55 = scmp.eq.s32.totalorder %s54, 0
      %s57 = sadd.s32 %s56, 1
      %s58 = scalar_select %p55, %s56, %s57
      %p61 = pneg %p55
      %p62 = scmp.eq.s32.totalorder %s20, 1
      %p63 = por %p61, %p62
      %p64 = scmp.ne.s32.totalorder %s56, %s59
      %p65 = scmp.eq.s32.totalorder %s20, 0
      %p66 = por %p64, %p65
      %p67 = scmp.ne.s32.totalorder %s56, %s59
      %p68 = scmp.eq.s32.totalorder %s25, 1
      %p69 = por %p67, %p68
      %p70 = scmp.ne.s32.totalorder %s59, %s60
      %p71 = scmp.eq.s32.totalorder %s25, 0
      %p72 = por %p70, %p71
      %p73 = scmp.ne.s32.totalorder %s59, %s60
      %p74 = scmp.eq.s32.totalorder %s26, 1
      %p75 = por %p73, %p74
      %p77 = scmp.ne.s32.totalorder %s60, %s76
      %p78 = scmp.eq.s32.totalorder %s26, 0
      %p79 = por %p77, %p78
      %s81 = sadd.s32 %s80, 1
      %p84 = scmp.eq.s32.totalorder %s20, 1
      %p85 = scmp.ne.s32.totalorder %s80, %s82
      %p86 = scmp.eq.s32.totalorder %s20, 0
      %p87 = por %p85, %p86
      %p88 = scmp.ne.s32.totalorder %s80, %s82
      %p89 = scmp.eq.s32.totalorder %s25, 1
      %p90 = por %p88, %p89
      %p91 = scmp.ne.s32.totalorder %s82, %s83
      %p92 = scmp.eq.s32.totalorder %s25, 0
      %p93 = por %p91, %p92
      %p94 = scmp.ne.s32.totalorder %s82, %s83
      %p95 = scmp.eq.s32.totalorder %s26, 1
      %p96 = por %p94, %p95
      %p98 = scmp.ne.s32.totalorder %s83, %s97
      %p99 = scmp.eq.s32.totalorder %s26, 0
      %p100 = por %p98, %p99
      %s102 = sadd.s32 %s101, 1
      %p105 = scmp.eq.s32.totalorder %s20, 1
      %p106 = scmp.ne.s32.totalorder %s101, %s103
      %p107 = scmp.eq.s32.totalorder %s20, 0
      %p108 = por %p106, %p107
      %p109 = scmp.ne.s32.totalorder %s101, %s103
      %p110 = scmp.eq.s32.totalorder %s25, 1
      %p111 = por %p109, %p110
      %p112 = scmp.ne.s32.totalorder %s103, %s104
      %p113 = scmp.eq.s32.totalorder %s25, 0
      %p114 = por %p112, %p113
      %p115 = scmp.ne.s32.totalorder %s103, %s104
      %p116 = scmp.eq.s32.totalorder %s26, 1
      %p117 = por %p115, %p116
      %p119 = scmp.ne.s32.totalorder %s104, %s118
      %p120 = scmp.eq.s32.totalorder %s26, 0
      %p121 = por %p119, %p120
      %s122 = ssub.s32 %s20, %s27
      %p123 = scmp.eq.s32.totalorder %s122, 0
      %s125 = sadd.s32 %s124, 1
      %s126 = scalar_select %p123, %s124, %s125
      %p129 = pneg %p123
      %p130 = scmp.eq.s32.totalorder %s20, 1
      %p131 = por %p129, %p130
      %p132 = scmp.ne.s32.totalorder %s124, %s127
      %p133 = scmp.eq.s32.totalorder %s20, 0
      %p134 = por %p132, %p133
      %p135 = scmp.ne.s32.totalorder %s124, %s127
      %p136 = scmp.eq.s32.totalorder %s25, 1
      %p137 = por %p135, %p136
      %p138 = scmp.ne.s32.totalorder %s127, %s128
      %p139 = scmp.eq.s32.totalorder %s25, 0
      %p140 = por %p138, %p139
      %p141 = scmp.ne.s32.totalorder %s127, %s128
      %p142 = scmp.eq.s32.totalorder %s26, 1
      %p143 = por %p141, %p142
      %p145 = scmp.ne.s32.totalorder %s128, %s144
      %p146 = scmp.eq.s32.totalorder %s26, 0
      %p147 = por %p145, %p146
      %p148 = scmp.le.s32.totalorder 1, %s20
      %p149 = scmp.lt.s32.totalorder %s20, 3
      %p150 = pnand %p148, %p149
      %p151 = pneg %p150
      // Predicated region
      $region9: #{tpu_custom_call.1} parent=5 // pred_check
        _
      $region10: #{tpu_custom_call.1} parent=5 // pred_check_branch
        %153 = sbr.rel (%p150) target = $region12
      $region11: #{tpu_custom_call.1} parent=5 // pred_region
        %s154 = ssub.s32 %s20, 1
        // Predicated region
        $region13: #{tpu_custom_call.1} parent=11 // pred_check
          %p155 = pneg %p93
        $region14: #{tpu_custom_call.1} parent=11 // pred_check_branch
          %157 = sbr.rel (%p155) target = $region16
        $region15: #{tpu_custom_call.1} parent=11 // pred_region
          %s159 = ssub.s32 128, 128
          %160 = vsyncadd [#allocation6], %s159
          %s162 = sshll.u32 [#allocation7], 4
          %s163 = int_to_ptr.vmem [resolvable:$true] %s162
          %165 = dma.hbm_to_vmem [thread:$0]  %s2, 128, %s163, [#allocation6]
        $region16: #{tpu_custom_call.1} parent=11 // pred_fallthru
          _
        // Predicated region
        $region17: #{tpu_custom_call.1} parent=11 // pred_check
          %p166 = pneg %p114
        $region18: #{tpu_custom_call.1} parent=11 // pred_check_branch
          %168 = sbr.rel (%p166) target = $region20
        $region19: #{tpu_custom_call.1} parent=11 // pred_region
          %s170 = ssub.s32 256, 256
          %171 = vsyncadd [#allocation9], %s170
          %s173 = sshll.u32 [#allocation8], 4
          %s174 = int_to_ptr.vmem [resolvable:$true] %s173
          %176 = dma.hbm_to_vmem [thread:$0]  %s3, 256, %s174, [#allocation9]
        $region20: #{tpu_custom_call.1} parent=11 // pred_fallthru
          _
      $region12: #{tpu_custom_call.1} parent=5 // pred_fallthru
        _
      %p177 = scmp.lt.s32.totalorder %s20, 2
      // Predicated region
      $region21: #{tpu_custom_call.1} parent=5 // pred_check
        %p178 = pneg %p177
      $region22: #{tpu_custom_call.1} parent=5 // pred_check_branch
        %180 = sbr.rel (%p178) target = $region24
      $region23: #{tpu_custom_call.1} parent=5 // pred_region
        // Predicated region
        $region25: #{tpu_custom_call.1} parent=23 // pred_check
          %p181 = pneg %p40
        $region26: #{tpu_custom_call.1} parent=23 // pred_check_branch
          %183 = sbr.rel (%p181) target = $region28
        $region27: #{tpu_custom_call.1} parent=23 // pred_region
          %s184 = sand.u32 %s30, 1
          %s185 = scalar_lea.sflag [#allocation3], %s184
          %s186 = sand.u32 %s30, 1
          %s187 = smul.addr %s186, 2
          %s188 = scalar_lea.vmem [#allocation2], %s187
          %s189 = smul.u32 2, %s20
          %s191 = ssub.s32 32, 32
          %192 = vsyncadd %s185, %s191
          %s193 = smul.addr %s189, 16
          %s194 = scalar_lea.hbm %s0, %s193
          %s196 = sshll.u32 %s188, 4
          %s197 = int_to_ptr.vmem [resolvable:$true] %s196
          %199 = dma.hbm_to_vmem [thread:$0]  %s194, 32, %s197, %s185
        $region28: #{tpu_custom_call.1} parent=23 // pred_fallthru
          _
        // Predicated region
        $region29: #{tpu_custom_call.1} parent=23 // pred_check
          %p200 = pneg %p66
        $region30: #{tpu_custom_call.1} parent=23 // pred_check_branch
          %202 = sbr.rel (%p200) target = $region32
        $region31: #{tpu_custom_call.1} parent=23 // pred_region
          %s203 = sand.u32 %s20, 1
          %s204 = scalar_lea.sflag [#allocation6], %s203
          %s205 = sand.u32 %s56, 1
          %s206 = smul.addr %s205, 2
          %s207 = scalar_lea.vmem [#allocation5], %s206
          %s208 = smul.u32 2, %s20
          %s210 = ssub.s32 32, 32
          %211 = vsyncadd %s204, %s210
          %s212 = smul.addr %s208, 16
          %s213 = scalar_lea.hbm %s1, %s212
          %s215 = sshll.u32 %s207, 4
          %s216 = int_to_ptr.vmem [resolvable:$true] %s215
          %218 = dma.hbm_to_vmem [thread:$0]  %s213, 32, %s216, %s204
        $region32: #{tpu_custom_call.1} parent=23 // pred_fallthru
          _
      $region24: #{tpu_custom_call.1} parent=5 // pred_fallthru
        _
      %p219 = scmp.le.s32.totalorder 1, %s20
      %p220 = scmp.lt.s32.totalorder %s20, 3
      %p221 = pnand %p219, %p220
      %p222 = pneg %p221
      // Predicated region
      $region33: #{tpu_custom_call.1} parent=5 // pred_check
        _
      $region34: #{tpu_custom_call.1} parent=5 // pred_check_branch
        %224 = sbr.rel (%p221) target = $region36
      $region35: #{tpu_custom_call.1} parent=5 // pred_region
        %s225 = ssub.s32 %s20, 1
        %s226 = sand.u32 %s33, 1
        %s227 = scalar_lea.sflag [#allocation3], %s226
        %s228 = sand.u32 %s33, 1
        %s229 = smul.addr %s228, 2
        %s230 = scalar_lea.vmem [#allocation2], %s229
        // Predicated region
        $region37: #{tpu_custom_call.1} parent=35 // pred_check
          %p231 = pneg %p46
        $region38: #{tpu_custom_call.1} parent=35 // pred_check_branch
          %233 = sbr.rel (%p231) target = $region40
        $region39: #{tpu_custom_call.1} parent=35 // pred_region
          %234 = dma.done %s227, 32
        $region40: #{tpu_custom_call.1} parent=35 // pred_fallthru
          _
        %s235 = sand.u32 %s25, 1
        %s236 = scalar_lea.sflag [#allocation6], %s235
        %s237 = sand.u32 %s59, 1
        %s238 = smul.addr %s237, 2
        %s239 = scalar_lea.vmem [#allocation5], %s238
        // Predicated region
        $region41: #{tpu_custom_call.1} parent=35 // pred_check
          %p240 = pneg %p72
        $region42: #{tpu_custom_call.1} parent=35 // pred_check_branch
          %242 = sbr.rel (%p240) target = $region44
        $region43: #{tpu_custom_call.1} parent=35 // pred_region
          %243 = dma.done %s236, 32
        $region44: #{tpu_custom_call.1} parent=35 // pred_fallthru
          _
        // Predicated region
        $region45: #{tpu_custom_call.1} parent=35 // pred_check
          %p244 = pneg %p93
        $region46: #{tpu_custom_call.1} parent=35 // pred_check_branch
          %246 = sbr.rel (%p244) target = $region48
        $region47: #{tpu_custom_call.1} parent=35 // pred_region
          %247 = dma.done [#allocation6], 128
        $region48: #{tpu_custom_call.1} parent=35 // pred_fallthru
          _
        // Predicated region
        $region49: #{tpu_custom_call.1} parent=35 // pred_check
          %p248 = pneg %p114
        $region50: #{tpu_custom_call.1} parent=35 // pred_check_branch
          %250 = sbr.rel (%p248) target = $region52
        $region51: #{tpu_custom_call.1} parent=35 // pred_region
          %251 = dma.done [#allocation9], 256
        $region52: #{tpu_custom_call.1} parent=35 // pred_fallthru
          _
        %s252 = sand.u32 %s33, 1
        %s253 = scalar_lea.sflag [#allocation3], %s252
        %s254 = sand.u32 %s33, 1
        %s255 = smul.addr %s254, 2
        %s256 = scalar_lea.vmem [#allocation2], %s255
        %p257 = pneg %p46
        %p258 = pneg %p43
        %s259 = sand.u32 %s25, 1
        %s260 = scalar_lea.sflag [#allocation6], %s259
        %s261 = sand.u32 %s59, 1
        %s262 = smul.addr %s261, 2
        %s263 = scalar_lea.vmem [#allocation5], %s262
        %p264 = pneg %p72
        %p265 = pneg %p69
        %p266 = pneg %p93
        %p267 = pneg %p90
        %p268 = pneg %p114
        %p269 = pneg %p111
        %p270 = pneg %p140
        %p271 = pneg %p137
        %s272 = sand.u32 %s127, 1
        %s273 = scalar_lea.sflag [#allocation4], %s272
        %s274 = sand.u32 %s127, 1
        %s275 = smul.addr %s274, 2
        %s276 = scalar_lea.vmem [#allocation10], %s275
        %s277 = smul.u32 2, %s25
        %s278 = smul.u32 2, %s25
        %s279 = smul.u32 2, %s25
        %v280 = vlaneseq
        %v281 = vshrl.u32 %v280, 7
        %v282 = vadd.s32 %v281, 8
        %v283 = vadd.s32 %v281, 16
        %v284 = vadd.s32 %v281, 24
        %v285 = vadd.s32 %v281, 32
        %v286 = vadd.s32 %v281, 40
        %v287 = vadd.s32 %v281, 48
        %v288 = vadd.s32 %v281, 56
        %v289 = vadd.s32 %v281, 64
        %v290 = vadd.s32 %v281, 72
        %v291 = vadd.s32 %v281, 80
        %v292 = vadd.s32 %v281, 88
        %v293 = vadd.s32 %v281, 96
        %v294 = vadd.s32 %v281, 104
        %v295 = vadd.s32 %v281, 112
        %v296 = vadd.s32 %v281, 120
        %v297 = vadd.s32 %v281, 128
        %v298 = vadd.s32 %v281, 136
        %v299 = vadd.s32 %v281, 144
        %v300 = vadd.s32 %v281, 152
        %v301 = vadd.s32 %v281, 160
        %v302 = vadd.s32 %v281, 168
        %v303 = vadd.s32 %v281, 176
        %v304 = vadd.s32 %v281, 184
        %v305 = vadd.s32 %v281, 192
        %v306 = vld [vmem:[%s230] sm:$0x3]
        %v307 = vlaneseq
        %v308 = vshrl.u32 %v307, 7
        %v309 = vsub.s32 0, %v308
        %v310 = vrot.slane %v306, %v309
        %v311 = vlaneseq
        %v312 = vshrl.u32 %v311, 7
        %v313 = vsub.s32 1, %v312
        %v314 = vrot.slane %v306, %v313
        %vm315 = vcmp.eq.s32.totalorder %v281, %v310
        %vm316 = vcmp.eq.s32.totalorder %v281, %v314
        %vm317 = vcmp.eq.s32.totalorder %v282, %v310
        %vm318 = vcmp.eq.s32.totalorder %v282, %v314
        %vm319 = vcmp.eq.s32.totalorder %v283, %v310
        %vm320 = vcmp.eq.s32.totalorder %v283, %v314
        %vm321 = vcmp.eq.s32.totalorder %v284, %v310
        %vm322 = vcmp.eq.s32.totalorder %v284, %v314
        %vm323 = vcmp.eq.s32.totalorder %v285, %v310
        %vm324 = vcmp.eq.s32.totalorder %v285, %v314
        %vm325 = vcmp.eq.s32.totalorder %v286, %v310
        %vm326 = vcmp.eq.s32.totalorder %v286, %v314
        %vm327 = vcmp.eq.s32.totalorder %v287, %v310
        %vm328 = vcmp.eq.s32.totalorder %v287, %v314
        %vm329 = vcmp.eq.s32.totalorder %v288, %v310
        %vm330 = vcmp.eq.s32.totalorder %v288, %v314
        %vm331 = vcmp.eq.s32.totalorder %v289, %v310
        %vm332 = vcmp.eq.s32.totalorder %v289, %v314
        %vm333 = vcmp.eq.s32.totalorder %v290, %v310
        %vm334 = vcmp.eq.s32.totalorder %v290, %v314
        %vm335 = vcmp.eq.s32.totalorder %v291, %v310
        %vm336 = vcmp.eq.s32.totalorder %v291, %v314
        %vm337 = vcmp.eq.s32.totalorder %v292, %v310
        %vm338 = vcmp.eq.s32.totalorder %v292, %v314
        %vm339 = vcmp.eq.s32.totalorder %v293, %v310
        %vm340 = vcmp.eq.s32.totalorder %v293, %v314
        %v341 = vsel %vm315, 1.0, 0.0
        %v342 = vsel %vm316, 1.0, 0.0
        %v343 = vsel %vm317, 1.0, 0.0
        %v344 = vsel %vm318, 1.0, 0.0
        %v345 = vsel %vm319, 1.0, 0.0
        %v346 = vsel %vm320, 1.0, 0.0
        %v347 = vsel %vm321, 1.0, 0.0
        %v348 = vsel %vm322, 1.0, 0.0
        %v349 = vsel %vm323, 1.0, 0.0
        %v350 = vsel %vm324, 1.0, 0.0
        %v351 = vsel %vm325, 1.0, 0.0
        %v352 = vsel %vm326, 1.0, 0.0
        %v353 = vsel %vm327, 1.0, 0.0
        %v354 = vsel %vm328, 1.0, 0.0
        %v355 = vsel %vm329, 1.0, 0.0
        %v356 = vsel %vm330, 1.0, 0.0
        %v357 = vsel %vm331, 1.0, 0.0
        %v358 = vsel %vm332, 1.0, 0.0
        %v359 = vsel %vm333, 1.0, 0.0
        %v360 = vsel %vm334, 1.0, 0.0
        %v361 = vsel %vm335, 1.0, 0.0
        %v362 = vsel %vm336, 1.0, 0.0
        %v363 = vsel %vm337, 1.0, 0.0
        %v364 = vsel %vm338, 1.0, 0.0
        %v365 = vsel %vm339, 1.0, 0.0
        %v366 = vsel %vm340, 1.0, 0.0
        %v367 = vld [vmem:[%s239] sm:$0x3]
        %v368 = vlaneseq
        %v369 = vshrl.u32 %v368, 7
        %v370 = vsub.s32 0, %v369
        %v371 = vrot.slane %v367, %v370
        %v372 = vlaneseq
        %v373 = vshrl.u32 %v372, 7
        %v374 = vsub.s32 1, %v373
        %v375 = vrot.slane %v367, %v374
        %vm376 = vcmp.eq.s32.totalorder %v281, %v371
        %vm377 = vcmp.eq.s32.totalorder %v281, %v375
        %vm378 = vcmp.eq.s32.totalorder %v282, %v371
        %vm379 = vcmp.eq.s32.totalorder %v282, %v375
        %vm380 = vcmp.eq.s32.totalorder %v283, %v371
        %vm381 = vcmp.eq.s32.totalorder %v283, %v375
        %vm382 = vcmp.eq.s32.totalorder %v284, %v371
        %vm383 = vcmp.eq.s32.totalorder %v284, %v375
        %vm384 = vcmp.eq.s32.totalorder %v285, %v371
        %vm385 = vcmp.eq.s32.totalorder %v285, %v375
        %vm386 = vcmp.eq.s32.totalorder %v286, %v371
        %vm387 = vcmp.eq.s32.totalorder %v286, %v375
        %vm388 = vcmp.eq.s32.totalorder %v287, %v371
        %vm389 = vcmp.eq.s32.totalorder %v287, %v375
        %vm390 = vcmp.eq.s32.totalorder %v288, %v371
        %vm391 = vcmp.eq.s32.totalorder %v288, %v375
        %vm392 = vcmp.eq.s32.totalorder %v289, %v371
        %vm393 = vcmp.eq.s32.totalorder %v289, %v375
        %vm394 = vcmp.eq.s32.totalorder %v290, %v371
        %vm395 = vcmp.eq.s32.totalorder %v290, %v375
        %vm396 = vcmp.eq.s32.totalorder %v291, %v371
        %vm397 = vcmp.eq.s32.totalorder %v291, %v375
        %vm398 = vcmp.eq.s32.totalorder %v292, %v371
        %vm399 = vcmp.eq.s32.totalorder %v292, %v375
        %vm400 = vcmp.eq.s32.totalorder %v293, %v371
        %vm401 = vcmp.eq.s32.totalorder %v293, %v375
        %vm402 = vcmp.eq.s32.totalorder %v294, %v371
        %vm403 = vcmp.eq.s32.totalorder %v294, %v375
        %vm404 = vcmp.eq.s32.totalorder %v295, %v371
        %vm405 = vcmp.eq.s32.totalorder %v295, %v375
        %vm406 = vcmp.eq.s32.totalorder %v296, %v371
        %vm407 = vcmp.eq.s32.totalorder %v296, %v375
        %vm408 = vcmp.eq.s32.totalorder %v297, %v371
        %vm409 = vcmp.eq.s32.totalorder %v297, %v375
        %vm410 = vcmp.eq.s32.totalorder %v298, %v371
        %vm411 = vcmp.eq.s32.totalorder %v298, %v375
        %vm412 = vcmp.eq.s32.totalorder %v299, %v371
        %vm413 = vcmp.eq.s32.totalorder %v299, %v375
        %vm414 = vcmp.eq.s32.totalorder %v300, %v371
        %vm415 = vcmp.eq.s32.totalorder %v300, %v375
        %vm416 = vcmp.eq.s32.totalorder %v301, %v371
        %vm417 = vcmp.eq.s32.totalorder %v301, %v375
        %vm418 = vcmp.eq.s32.totalorder %v302, %v371
        %vm419 = vcmp.eq.s32.totalorder %v302, %v375
        %vm420 = vcmp.eq.s32.totalorder %v303, %v371
        %vm421 = vcmp.eq.s32.totalorder %v303, %v375
        %vm422 = vcmp.eq.s32.totalorder %v304, %v371
        %vm423 = vcmp.eq.s32.totalorder %v304, %v375
        %vm424 = vcmp.eq.s32.totalorder %v305, %v371
        %vm425 = vcmp.eq.s32.totalorder %v305, %v375
        %v426 = vsel %vm376, 1.0, 0.0
        %v427 = vsel %vm377, 1.0, 0.0
        %v428 = vsel %vm378, 1.0, 0.0
        %v429 = vsel %vm379, 1.0, 0.0
        %v430 = vsel %vm380, 1.0, 0.0
        %v431 = vsel %vm381, 1.0, 0.0
        %v432 = vsel %vm382, 1.0, 0.0
        %v433 = vsel %vm383, 1.0, 0.0
        %v434 = vsel %vm384, 1.0, 0.0
        %v435 = vsel %vm385, 1.0, 0.0
        %v436 = vsel %vm386, 1.0, 0.0
        %v437 = vsel %vm387, 1.0, 0.0
        %v438 = vsel %vm388, 1.0, 0.0
        %v439 = vsel %vm389, 1.0, 0.0
        %v440 = vsel %vm390, 1.0, 0.0
        %v441 = vsel %vm391, 1.0, 0.0
        %v442 = vsel %vm392, 1.0, 0.0
        %v443 = vsel %vm393, 1.0, 0.0
        %v444 = vsel %vm394, 1.0, 0.0
        %v445 = vsel %vm395, 1.0, 0.0
        %v446 = vsel %vm396, 1.0, 0.0
        %v447 = vsel %vm397, 1.0, 0.0
        %v448 = vsel %vm398, 1.0, 0.0
        %v449 = vsel %vm399, 1.0, 0.0
        %v450 = vsel %vm400, 1.0, 0.0
        %v451 = vsel %vm401, 1.0, 0.0
        %v452 = vsel %vm402, 1.0, 0.0
        %v453 = vsel %vm403, 1.0, 0.0
        %v454 = vsel %vm404, 1.0, 0.0
        %v455 = vsel %vm405, 1.0, 0.0
        %v456 = vsel %vm406, 1.0, 0.0
        %v457 = vsel %vm407, 1.0, 0.0
        %v458 = vsel %vm408, 1.0, 0.0
        %v459 = vsel %vm409, 1.0, 0.0
        %v460 = vsel %vm410, 1.0, 0.0
        %v461 = vsel %vm411, 1.0, 0.0
        %v462 = vsel %vm412, 1.0, 0.0
        %v463 = vsel %vm413, 1.0, 0.0
        %v464 = vsel %vm414, 1.0, 0.0
        %v465 = vsel %vm415, 1.0, 0.0
        %v466 = vsel %vm416, 1.0, 0.0
        %v467 = vsel %vm417, 1.0, 0.0
        %v468 = vsel %vm418, 1.0, 0.0
        %v469 = vsel %vm419, 1.0, 0.0
        %v470 = vsel %vm420, 1.0, 0.0
        %v471 = vsel %vm421, 1.0, 0.0
        %v472 = vsel %vm422, 1.0, 0.0
        %v473 = vsel %vm423, 1.0, 0.0
        %v474 = vsel %vm424, 1.0, 0.0
        %v475 = vsel %vm425, 1.0, 0.0
        %v476 = vld [vmem:[#allocation7] sm:$0xff]
        %vm477 = vcmask 818176
        %v479 = vsel %vm477, %v476, 0
        %vm481 = vcmask 1043456
        %v483 = vsel %vm481, %v365, 0
        %v486 = vsel %vm481, %v366, 0
        %488 = vmatprep.subr.mxu0 %v342
        %489 = vmatpush1.msra.mxu0 %v341
        %490 = vmatprep.subr.mxu0 %v344
        %491 = vmatpush1.msra.mxu0 %v343
        %492 = vmatprep.subr.mxu0 %v346
        %493 = vmatpush1.msra.mxu0 %v345
        %494 = vmatprep.subr.mxu0 %v348
        %495 = vmatpush1.msra.mxu0 %v347
        %496 = vmatprep.subr.mxu0 %v350
        %497 = vmatpush1.msra.mxu0 %v349
        %498 = vmatprep.subr.mxu0 %v352
        %499 = vmatpush1.msra.mxu0 %v351
        %500 = vmatprep.subr.mxu0 %v354
        %501 = vmatpush1.msra.mxu0 %v353
        %502 = vmatprep.subr.mxu0 %v356
        %503 = vmatpush1.msra.mxu0 %v355
        %504 = vmatprep.subr.mxu0 %v358
        %505 = vmatpush1.msra.mxu0 %v357
        %506 = vmatprep.subr.mxu0 %v360
        %507 = vmatpush1.msra.mxu0 %v359
        %508 = vmatprep.subr.mxu0 %v362
        %509 = vmatpush1.msra.mxu0 %v361
        %510 = vmatprep.subr.mxu0 %v364
        %511 = vmatpush1.msra.mxu0 %v363
        %v512 = vand.u32 %v486, 4294901760
        %513 = vmatprep.subr.mxu0 %v512
        %v514 = vand.u32 %v483, 4294901760
        %515 = vmatpush1.msra.mxu0 %v514
        %516 = vmatprep.subr.mxu0 0.0
        %517 = vmatpush1.msra.mxu0 0.0
        %518 = vmatprep.subr.mxu0 0.0
        %519 = vmatpush1.msra.mxu0 0.0
        %520 = vmatprep.subr.mxu0 0.0
        %521 = vmatpush1.msra.mxu0 0.0
        %522 = vmatprep.subr.mxu0 0.0
        %523 = vmatpush1.msra.mxu0 0.0
        %524 = vmatprep.subr.mxu0 0.0
        %525 = vmatpush1.msra.mxu0 0.0
        %526 = vmatprep.subr.mxu0 0.0
        %527 = vmatpush1.msra.mxu0 0.0
        %528 = vmatprep.subr.mxu0 0.0
        %529 = vmatpush1.msra.mxu0 0.0
        %530 = vmatprep.subr.mxu0 0.0
        %531 = vmatpush1.msra.mxu0 0.0
        %532 = vmatprep.subr.mxu0 0.0
        %533 = vmatpush1.msra.mxu0 0.0
        %534 = vmatprep.subr.mxu0 0.0
        %535 = vmatpush1.msra.mxu0 0.0
        %536 = vmatprep.subr.mxu0 0.0
        %537 = vmatpush1.msra.mxu0 0.0
        %538 = vmatprep.subr.mxu0 0.0
        %539 = vmatpush1.msra.mxu0 0.0
        %540 = vmatprep.subr.mxu0 0.0
        %541 = vmatpush1.msra.mxu0 0.0
        %542 = vmatprep.subr.mxu0 0.0
        %543 = vmatpush1.msra.mxu0 0.0
        %544 = vmatprep.subr.mxu0 0.0
        %545 = vmatpush1.msra.mxu0 0.0
        %546 = vmatprep.subr.mxu0 0.0
        %547 = vmatpush1.msra.mxu0 0.0
        %548 = vmatprep.subr.mxu0 0.0
        %549 = vmatpush1.msra.mxu0 0.0
        %550 = vmatprep.subr.mxu0 0.0
        %551 = vmatpush1.msra.mxu0 0.0
        %552 = vmatprep.subr.mxu0 0.0
        %553 = vmatpush1.msra.mxu0 0.0
        %554 = vmatprep.mubr.f32.mxu0 0.0
        %v555 = vand.u32 %v479, 4294901760
        %v556 = vsub.f32 %v479, %v555
        %v557 = vand.u32 %v556, 4294901760
        %v558 = vsub.f32 %v556, %v557
        %v559 = vand.u32 %v558, 4294901760
        %560 = vmatmul.mubr.f32.gmra.mrb[0].mxu0 %v559
        %v561 = vpop.f32.mrb[0].mxu0
        %v562 = vadd.f32 0.0, %v561
        %v563 = vpop.f32.mrb[0].mxu0
        %v564 = vadd.f32 0.0, %v563
        %565 = vdwg.mxu0
        %v566 = vsub.f32 %v342, %v342
        %v567 = vand.u32 %v566, 4294901760
        %v568 = vsub.f32 %v566, %v567
        %v569 = vand.u32 %v568, 4294901760
        %570 = vmatprep.subr.mxu0 %v569
        %v571 = vsub.f32 %v341, %v341
        %v572 = vand.u32 %v571, 4294901760
        %v573 = vsub.f32 %v571, %v572
        %v574 = vand.u32 %v573, 4294901760
        %575 = vmatpush1.msra.mxu0 %v574
        %v576 = vsub.f32 %v344, %v344
        %v577 = vand.u32 %v576, 4294901760
        %v578 = vsub.f32 %v576, %v577
        %v579 = vand.u32 %v578, 4294901760
        %580 = vmatprep.subr.mxu0 %v579
        %v581 = vsub.f32 %v343, %v343
        %v582 = vand.u32 %v581, 4294901760
        %v583 = vsub.f32 %v581, %v582
        %v584 = vand.u32 %v583, 4294901760
        %585 = vmatpush1.msra.mxu0 %v584
        %v586 = vsub.f32 %v346, %v346
        %v587 = vand.u32 %v586, 4294901760
        %v588 = vsub.f32 %v586, %v587
        %v589 = vand.u32 %v588, 4294901760
        %590 = vmatprep.subr.mxu0 %v589
        %v591 = vsub.f32 %v345, %v345
        %v592 = vand.u32 %v591, 4294901760
        %v593 = vsub.f32 %v591, %v592
        %v594 = vand.u32 %v593, 4294901760
        %595 = vmatpush1.msra.mxu0 %v594
        %v596 = vsub.f32 %v348, %v348
        %v597 = vand.u32 %v596, 4294901760
        %v598 = vsub.f32 %v596, %v597
        %v599 = vand.u32 %v598, 4294901760
        %600 = vmatprep.subr.mxu0 %v599
        %v601 = vsub.f32 %v347, %v347
        %v602 = vand.u32 %v601, 4294901760
        %v603 = vsub.f32 %v601, %v602
        %v604 = vand.u32 %v603, 4294901760
        %605 = vmatpush1.msra.mxu0 %v604
        %v606 = vsub.f32 %v350, %v350
        %v607 = vand.u32 %v606, 4294901760
        %v608 = vsub.f32 %v606, %v607
        %v609 = vand.u32 %v608, 4294901760
        %610 = vmatprep.subr.mxu0 %v609
        %v611 = vsub.f32 %v349, %v349
        %v612 = vand.u32 %v611, 4294901760
        %v613 = vsub.f32 %v611, %v612
        %v614 = vand.u32 %v613, 4294901760
        %615 = vmatpush1.msra.mxu0 %v614
        %v616 = vsub.f32 %v352, %v352
        %v617 = vand.u32 %v616, 4294901760
        %v618 = vsub.f32 %v616, %v617
        %v619 = vand.u32 %v618, 4294901760
        %620 = vmatprep.subr.mxu0 %v619
        %v621 = vsub.f32 %v351, %v351
        %v622 = vand.u32 %v621, 4294901760
        %v623 = vsub.f32 %v621, %v622
        %v624 = vand.u32 %v623, 4294901760
        %625 = vmatpush1.msra.mxu0 %v624
        %v626 = vsub.f32 %v354, %v354
        %v627 = vand.u32 %v626, 4294901760
        %v628 = vsub.f32 %v626, %v627
        %v629 = vand.u32 %v628, 4294901760
        %630 = vmatprep.subr.mxu0 %v629
        %v631 = vsub.f32 %v353, %v353
        %v632 = vand.u32 %v631, 4294901760
        %v633 = vsub.f32 %v631, %v632
        %v634 = vand.u32 %v633, 4294901760
        %635 = vmatpush1.msra.mxu0 %v634
        %v636 = vsub.f32 %v356, %v356
        %v637 = vand.u32 %v636, 4294901760
        %v638 = vsub.f32 %v636, %v637
        %v639 = vand.u32 %v638, 4294901760
        %640 = vmatprep.subr.mxu0 %v639
        %v641 = vsub.f32 %v355, %v355
        %v642 = vand.u32 %v641, 4294901760
        %v643 = vsub.f32 %v641, %v642
        %v644 = vand.u32 %v643, 4294901760
        %645 = vmatpush1.msra.mxu0 %v644
        %v646 = vsub.f32 %v358, %v358
        %v647 = vand.u32 %v646, 4294901760
        %v648 = vsub.f32 %v646, %v647
        %v649 = vand.u32 %v648, 4294901760
        %650 = vmatprep.subr.mxu0 %v649
        %v651 = vsub.f32 %v357, %v357
        %v652 = vand.u32 %v651, 4294901760
        %v653 = vsub.f32 %v651, %v652
        %v654 = vand.u32 %v653, 4294901760
        %655 = vmatpush1.msra.mxu0 %v654
        %v656 = vsub.f32 %v360, %v360
        %v657 = vand.u32 %v656, 4294901760
        %v658 = vsub.f32 %v656, %v657
        %v659 = vand.u32 %v658, 4294901760
        %660 = vmatprep.subr.mxu0 %v659
        %v661 = vsub.f32 %v359, %v359
        %v662 = vand.u32 %v661, 4294901760
        %v663 = vsub.f32 %v661, %v662
        %v664 = vand.u32 %v663, 4294901760
        %665 = vmatpush1.msra.mxu0 %v664
        %v666 = vsub.f32 %v362, %v362
        %v667 = vand.u32 %v666, 4294901760
        %v668 = vsub.f32 %v666, %v667
        %v669 = vand.u32 %v668, 4294901760
        %670 = vmatprep.subr.mxu0 %v669
        %v671 = vsub.f32 %v361, %v361
        %v672 = vand.u32 %v671, 4294901760
        %v673 = vsub.f32 %v671, %v672
        %v674 = vand.u32 %v673, 4294901760
        %675 = vmatpush1.msra.mxu0 %v674
        %v676 = vsub.f32 %v364, %v364
        %v677 = vand.u32 %v676, 4294901760
        %v678 = vsub.f32 %v676, %v677
        %v679 = vand.u32 %v678, 4294901760
        %680 = vmatprep.subr.mxu0 %v679
        %v681 = vsub.f32 %v363, %v363
        %v682 = vand.u32 %v681, 4294901760
        %v683 = vsub.f32 %v681, %v682
        %v684 = vand.u32 %v683, 4294901760
        %685 = vmatpush1.msra.mxu0 %v684
        %v686 = vand.u32 %v486, 4294901760
        %v687 = vsub.f32 %v486, %v686
        %v688 = vand.u32 %v687, 4294901760
        %v689 = vsub.f32 %v687, %v688
        %v690 = vand.u32 %v689, 4294901760
        %691 = vmatprep.subr.mxu0 %v690
        %v692 = vand.u32 %v483, 4294901760
        %v693 = vsub.f32 %v483, %v692
        %v694 = vand.u32 %v693, 4294901760
        %v695 = vsub.f32 %v693, %v694
        %v696 = vand.u32 %v695, 4294901760
        %697 = vmatpush1.msra.mxu0 %v696
        %698 = vmatprep.subr.mxu0 0.0
        %699 = vmatpush1.msra.mxu0 0.0
        %700 = vmatprep.subr.mxu0 0.0
        %701 = vmatpush1.msra.mxu0 0.0
        %702 = vmatprep.subr.mxu0 0.0
        %703 = vmatpush1.msra.mxu0 0.0
        %704 = vmatprep.subr.mxu0 0.0
        %705 = vmatpush1.msra.mxu0 0.0
        %706 = vmatprep.subr.mxu0 0.0
        %707 = vmatpush1.msra.mxu0 0.0
        %708 = vmatprep.subr.mxu0 0.0
        %709 = vmatpush1.msra.mxu0 0.0
        %710 = vmatprep.subr.mxu0 0.0
        %711 = vmatpush1.msra.mxu0 0.0
        %712 = vmatprep.subr.mxu0 0.0
        %713 = vmatpush1.msra.mxu0 0.0
        %714 = vmatprep.subr.mxu0 0.0
        %715 = vmatpush1.msra.mxu0 0.0
        %716 = vmatprep.subr.mxu0 0.0
        %717 = vmatpush1.msra.mxu0 0.0
        %718 = vmatprep.subr.mxu0 0.0
        %719 = vmatpush1.msra.mxu0 0.0
        %720 = vmatprep.subr.mxu0 0.0
        %721 = vmatpush1.msra.mxu0 0.0
        %722 = vmatprep.subr.mxu0 0.0
        %723 = vmatpush1.msra.mxu0 0.0
        %724 = vmatprep.subr.mxu0 0.0
        %725 = vmatpush1.msra.mxu0 0.0
        %726 = vmatprep.subr.mxu0 0.0
        %727 = vmatpush1.msra.mxu0 0.0
        %728 = vmatprep.subr.mxu0 0.0
        %729 = vmatpush1.msra.mxu0 0.0
        %730 = vmatprep.subr.mxu0 0.0
        %731 = vmatpush1.msra.mxu0 0.0
        %732 = vmatprep.subr.mxu0 0.0
        %733 = vmatpush1.msra.mxu0 0.0
        %734 = vmatprep.subr.mxu0 0.0
        %735 = vmatpush1.msra.mxu0 0.0
        %736 = vmatprep.mubr.f32.mxu0 0.0
        %v737 = vand.u32 %v479, 4294901760
        %738 = vmatmul.mubr.f32.gmra.mrb[0].mxu0 %v737
        %v739 = vpop.f32.mrb[0].mxu0
        %v740 = vadd.f32 %v562, %v739
        %v741 = vpop.f32.mrb[0].mxu0
        %v742 = vadd.f32 %v564, %v741
        %743 = vdwg.mxu0
        %v744 = vsub.f32 %v342, %v342
        %745 = vmatprep.subr.mxu0 %v744
        %v746 = vsub.f32 %v341, %v341
        %747 = vmatpush1.msra.mxu0 %v746
        %v748 = vsub.f32 %v344, %v344
        %749 = vmatprep.subr.mxu0 %v748
        %v750 = vsub.f32 %v343, %v343
        %751 = vmatpush1.msra.mxu0 %v750
        %v752 = vsub.f32 %v346, %v346
        %753 = vmatprep.subr.mxu0 %v752
        %v754 = vsub.f32 %v345, %v345
        %755 = vmatpush1.msra.mxu0 %v754
        %v756 = vsub.f32 %v348, %v348
        %757 = vmatprep.subr.mxu0 %v756
        %v758 = vsub.f32 %v347, %v347
        %759 = vmatpush1.msra.mxu0 %v758
        %v760 = vsub.f32 %v350, %v350
        %761 = vmatprep.subr.mxu0 %v760
        %v762 = vsub.f32 %v349, %v349
        %763 = vmatpush1.msra.mxu0 %v762
        %v764 = vsub.f32 %v352, %v352
        %765 = vmatprep.subr.mxu0 %v764
        %v766 = vsub.f32 %v351, %v351
        %767 = vmatpush1.msra.mxu0 %v766
        %v768 = vsub.f32 %v354, %v354
        %769 = vmatprep.subr.mxu0 %v768
        %v770 = vsub.f32 %v353, %v353
        %771 = vmatpush1.msra.mxu0 %v770
        %v772 = vsub.f32 %v356, %v356
        %773 = vmatprep.subr.mxu0 %v772
        %v774 = vsub.f32 %v355, %v355
        %775 = vmatpush1.msra.mxu0 %v774
        %v776 = vsub.f32 %v358, %v358
        %777 = vmatprep.subr.mxu0 %v776
        %v778 = vsub.f32 %v357, %v357
        %779 = vmatpush1.msra.mxu0 %v778
        %v780 = vsub.f32 %v360, %v360
        %781 = vmatprep.subr.mxu0 %v780
        %v782 = vsub.f32 %v359, %v359
        %783 = vmatpush1.msra.mxu0 %v782
        %v784 = vsub.f32 %v362, %v362
        %785 = vmatprep.subr.mxu0 %v784
        %v786 = vsub.f32 %v361, %v361
        %787 = vmatpush1.msra.mxu0 %v786
        %v788 = vsub.f32 %v364, %v364
        %789 = vmatprep.subr.mxu0 %v788
        %v790 = vsub.f32 %v363, %v363
        %791 = vmatpush1.msra.mxu0 %v790
        %v792 = vand.u32 %v486, 4294901760
        %v793 = vsub.f32 %v486, %v792
        %794 = vmatprep.subr.mxu0 %v793
        %v795 = vand.u32 %v483, 4294901760
        %v796 = vsub.f32 %v483, %v795
        %797 = vmatpush1.msra.mxu0 %v796
        %798 = vmatprep.subr.mxu0 0.0
        %799 = vmatpush1.msra.mxu0 0.0
        %800 = vmatprep.subr.mxu0 0.0
        %801 = vmatpush1.msra.mxu0 0.0
        %802 = vmatprep.subr.mxu0 0.0
        %803 = vmatpush1.msra.mxu0 0.0
        %804 = vmatprep.subr.mxu0 0.0
        %805 = vmatpush1.msra.mxu0 0.0
        %806 = vmatprep.subr.mxu0 0.0
        %807 = vmatpush1.msra.mxu0 0.0
        %808 = vmatprep.subr.mxu0 0.0
        %809 = vmatpush1.msra.mxu0 0.0
        %810 = vmatprep.subr.mxu0 0.0
        %811 = vmatpush1.msra.mxu0 0.0
        %812 = vmatprep.subr.mxu0 0.0
        %813 = vmatpush1.msra.mxu0 0.0
        %814 = vmatprep.subr.mxu0 0.0
        %815 = vmatpush1.msra.mxu0 0.0
        %816 = vmatprep.subr.mxu0 0.0
        %817 = vmatpush1.msra.mxu0 0.0
        %818 = vmatprep.subr.mxu0 0.0
        %819 = vmatpush1.msra.mxu0 0.0
        %820 = vmatprep.subr.mxu0 0.0
        %821 = vmatpush1.msra.mxu0 0.0
        %822 = vmatprep.subr.mxu0 0.0
        %823 = vmatpush1.msra.mxu0 0.0
        %824 = vmatprep.subr.mxu0 0.0
        %825 = vmatpush1.msra.mxu0 0.0
        %826 = vmatprep.subr.mxu0 0.0
        %827 = vmatpush1.msra.mxu0 0.0
        %828 = vmatprep.subr.mxu0 0.0
        %829 = vmatpush1.msra.mxu0 0.0
        %830 = vmatprep.subr.mxu0 0.0
        %831 = vmatpush1.msra.mxu0 0.0
        %832 = vmatprep.subr.mxu0 0.0
        %833 = vmatpush1.msra.mxu0 0.0
        %834 = vmatprep.subr.mxu0 0.0
        %835 = vmatpush1.msra.mxu0 0.0
        %836 = vmatprep.mubr.f32.mxu0 0.0
        %v837 = vand.u32 %v479, 4294901760
        %v838 = vsub.f32 %v479, %v837
        %839 = vmatmul.mubr.f32.gmra.mrb[0].mxu0 %v838
        %v840 = vpop.f32.mrb[0].mxu0
        %v841 = vadd.f32 %v740, %v840
        %v842 = vpop.f32.mrb[0].mxu0
        %v843 = vadd.f32 %v742, %v842
        %844 = vdwg.mxu0
        %845 = vmatprep.subr.mxu0 %v342
        %846 = vmatpush1.msra.mxu0 %v341
        %847 = vmatprep.subr.mxu0 %v344
        %848 = vmatpush1.msra.mxu0 %v343
        %849 = vmatprep.subr.mxu0 %v346
        %850 = vmatpush1.msra.mxu0 %v345
        %851 = vmatprep.subr.mxu0 %v348
        %852 = vmatpush1.msra.mxu0 %v347
        %853 = vmatprep.subr.mxu0 %v350
        %854 = vmatpush1.msra.mxu0 %v349
        %855 = vmatprep.subr.mxu0 %v352
        %856 = vmatpush1.msra.mxu0 %v351
        %857 = vmatprep.subr.mxu0 %v354
        %858 = vmatpush1.msra.mxu0 %v353
        %859 = vmatprep.subr.mxu0 %v356
        %860 = vmatpush1.msra.mxu0 %v355
        %861 = vmatprep.subr.mxu0 %v358
        %862 = vmatpush1.msra.mxu0 %v357
        %863 = vmatprep.subr.mxu0 %v360
        %864 = vmatpush1.msra.mxu0 %v359
        %865 = vmatprep.subr.mxu0 %v362
        %866 = vmatpush1.msra.mxu0 %v361
        %867 = vmatprep.subr.mxu0 %v364
        %868 = vmatpush1.msra.mxu0 %v363
        %v869 = vand.u32 %v486, 4294901760
        %870 = vmatprep.subr.mxu0 %v869
        %v871 = vand.u32 %v483, 4294901760
        %872 = vmatpush1.msra.mxu0 %v871
        %873 = vmatprep.subr.mxu0 0.0
        %874 = vmatpush1.msra.mxu0 0.0
        %875 = vmatprep.subr.mxu0 0.0
        %876 = vmatpush1.msra.mxu0 0.0
        %877 = vmatprep.subr.mxu0 0.0
        %878 = vmatpush1.msra.mxu0 0.0
        %879 = vmatprep.subr.mxu0 0.0
        %880 = vmatpush1.msra.mxu0 0.0
        %881 = vmatprep.subr.mxu0 0.0
        %882 = vmatpush1.msra.mxu0 0.0
        %883 = vmatprep.subr.mxu0 0.0
        %884 = vmatpush1.msra.mxu0 0.0
        %885 = vmatprep.subr.mxu0 0.0
        %886 = vmatpush1.msra.mxu0 0.0
        %887 = vmatprep.subr.mxu0 0.0
        %888 = vmatpush1.msra.mxu0 0.0
        %889 = vmatprep.subr.mxu0 0.0
        %890 = vmatpush1.msra.mxu0 0.0
        %891 = vmatprep.subr.mxu0 0.0
        %892 = vmatpush1.msra.mxu0 0.0
        %893 = vmatprep.subr.mxu0 0.0
        %894 = vmatpush1.msra.mxu0 0.0
        %895 = vmatprep.subr.mxu0 0.0
        %896 = vmatpush1.msra.mxu0 0.0
        %897 = vmatprep.subr.mxu0 0.0
        %898 = vmatpush1.msra.mxu0 0.0
        %899 = vmatprep.subr.mxu0 0.0
        %900 = vmatpush1.msra.mxu0 0.0
        %901 = vmatprep.subr.mxu0 0.0
        %902 = vmatpush1.msra.mxu0 0.0
        %903 = vmatprep.subr.mxu0 0.0
        %904 = vmatpush1.msra.mxu0 0.0
        %905 = vmatprep.subr.mxu0 0.0
        %906 = vmatpush1.msra.mxu0 0.0
        %907 = vmatprep.subr.mxu0 0.0
        %908 = vmatpush1.msra.mxu0 0.0
        %909 = vmatprep.subr.mxu0 0.0
        %910 = vmatpush1.msra.mxu0 0.0
        %911 = vmatprep.mubr.f32.mxu0 0.0
        %v912 = vand.u32 %v479, 4294901760
        %v913 = vsub.f32 %v479, %v912
        %v914 = vand.u32 %v913, 4294901760
        %915 = vmatmul.mubr.f32.gmra.mrb[0].mxu0 %v914
        %v916 = vpop.f32.mrb[0].mxu0
        %v917 = vadd.f32 %v841, %v916
        %v918 = vpop.f32.mrb[0].mxu0
        %v919 = vadd.f32 %v843, %v918
        %920 = vdwg.mxu0
        %v921 = vsub.f32 %v342, %v342
        %v922 = vand.u32 %v921, 4294901760
        %923 = vmatprep.subr.mxu0 %v922
        %v924 = vsub.f32 %v341, %v341
        %v925 = vand.u32 %v924, 4294901760
        %926 = vmatpush1.msra.mxu0 %v925
        %v927 = vsub.f32 %v344, %v344
        %v928 = vand.u32 %v927, 4294901760
        %929 = vmatprep.subr.mxu0 %v928
        %v930 = vsub.f32 %v343, %v343
        %v931 = vand.u32 %v930, 4294901760
        %932 = vmatpush1.msra.mxu0 %v931
        %v933 = vsub.f32 %v346, %v346
        %v934 = vand.u32 %v933, 4294901760
        %935 = vmatprep.subr.mxu0 %v934
        %v936 = vsub.f32 %v345, %v345
        %v937 = vand.u32 %v936, 4294901760
        %938 = vmatpush1.msra.mxu0 %v937
        %v939 = vsub.f32 %v348, %v348
        %v940 = vand.u32 %v939, 4294901760
        %941 = vmatprep.subr.mxu0 %v940
        %v942 = vsub.f32 %v347, %v347
        %v943 = vand.u32 %v942, 4294901760
        %944 = vmatpush1.msra.mxu0 %v943
        %v945 = vsub.f32 %v350, %v350
        %v946 = vand.u32 %v945, 4294901760
        %947 = vmatprep.subr.mxu0 %v946
        %v948 = vsub.f32 %v349, %v349
        %v949 = vand.u32 %v948, 4294901760
        %950 = vmatpush1.msra.mxu0 %v949
        %v951 = vsub.f32 %v352, %v352
        %v952 = vand.u32 %v951, 4294901760
        %953 = vmatprep.subr.mxu0 %v952
        %v954 = vsub.f32 %v351, %v351
        %v955 = vand.u32 %v954, 4294901760
        %956 = vmatpush1.msra.mxu0 %v955
        %v957 = vsub.f32 %v354, %v354
        %v958 = vand.u32 %v957, 4294901760
        %959 = vmatprep.subr.mxu0 %v958
        %v960 = vsub.f32 %v353, %v353
        %v961 = vand.u32 %v960, 4294901760
        %962 = vmatpush1.msra.mxu0 %v961
        %v963 = vsub.f32 %v356, %v356
        %v964 = vand.u32 %v963, 4294901760
        %965 = vmatprep.subr.mxu0 %v964
        %v966 = vsub.f32 %v355, %v355
        %v967 = vand.u32 %v966, 4294901760
        %968 = vmatpush1.msra.mxu0 %v967
        %v969 = vsub.f32 %v358, %v358
        %v970 = vand.u32 %v969, 4294901760
        %971 = vmatprep.subr.mxu0 %v970
        %v972 = vsub.f32 %v357, %v357
        %v973 = vand.u32 %v972, 4294901760
        %974 = vmatpush1.msra.mxu0 %v973
        %v975 = vsub.f32 %v360, %v360
        %v976 = vand.u32 %v975, 4294901760
        %977 = vmatprep.subr.mxu0 %v976
        %v978 = vsub.f32 %v359, %v359
        %v979 = vand.u32 %v978, 4294901760
        %980 = vmatpush1.msra.mxu0 %v979
        %v981 = vsub.f32 %v362, %v362
        %v982 = vand.u32 %v981, 4294901760
        %983 = vmatprep.subr.mxu0 %v982
        %v984 = vsub.f32 %v361, %v361
        %v985 = vand.u32 %v984, 4294901760
        %986 = vmatpush1.msra.mxu0 %v985
        %v987 = vsub.f32 %v364, %v364
        %v988 = vand.u32 %v987, 4294901760
        %989 = vmatprep.subr.mxu0 %v988
        %v990 = vsub.f32 %v363, %v363
        %v991 = vand.u32 %v990, 4294901760
        %992 = vmatpush1.msra.mxu0 %v991
        %v993 = vand.u32 %v486, 4294901760
        %v994 = vsub.f32 %v486, %v993
        %v995 = vand.u32 %v994, 4294901760
        %996 = vmatprep.subr.mxu0 %v995
        %v997 = vand.u32 %v483, 4294901760
        %v998 = vsub.f32 %v483, %v997
        %v999 = vand.u32 %v998, 4294901760
        %1000 = vmatpush1.msra.mxu0 %v999
        %1001 = vmatprep.subr.mxu0 0.0
        %1002 = vmatpush1.msra.mxu0 0.0
        %1003 = vmatprep.subr.mxu0 0.0
        %1004 = vmatpush1.msra.mxu0 0.0
        %1005 = vmatprep.subr.mxu0 0.0
        %1006 = vmatpush1.msra.mxu0 0.0
        %1007 = vmatprep.subr.mxu0 0.0
        %1008 = vmatpush1.msra.mxu0 0.0
        %1009 = vmatprep.subr.mxu0 0.0
        %1010 = vmatpush1.msra.mxu0 0.0
        %1011 = vmatprep.subr.mxu0 0.0
        %1012 = vmatpush1.msra.mxu0 0.0
        %1013 = vmatprep.subr.mxu0 0.0
        %1014 = vmatpush1.msra.mxu0 0.0
        %1015 = vmatprep.subr.mxu0 0.0
        %1016 = vmatpush1.msra.mxu0 0.0
        %1017 = vmatprep.subr.mxu0 0.0
        %1018 = vmatpush1.msra.mxu0 0.0
        %1019 = vmatprep.subr.mxu0 0.0
        %1020 = vmatpush1.msra.mxu0 0.0
        %1021 = vmatprep.subr.mxu0 0.0
        %1022 = vmatpush1.msra.mxu0 0.0
        %1023 = vmatprep.subr.mxu0 0.0
        %1024 = vmatpush1.msra.mxu0 0.0
        %1025 = vmatprep.subr.mxu0 0.0
        %1026 = vmatpush1.msra.mxu0 0.0
        %1027 = vmatprep.subr.mxu0 0.0
        %1028 = vmatpush1.msra.mxu0 0.0
        %1029 = vmatprep.subr.mxu0 0.0
        %1030 = vmatpush1.msra.mxu0 0.0
        %1031 = vmatprep.subr.mxu0 0.0
        %1032 = vmatpush1.msra.mxu0 0.0
        %1033 = vmatprep.subr.mxu0 0.0
        %1034 = vmatpush1.msra.mxu0 0.0
        %1035 = vmatprep.subr.mxu0 0.0
        %1036 = vmatpush1.msra.mxu0 0.0
        %1037 = vmatprep.subr.mxu0 0.0
        %1038 = vmatpush1.msra.mxu0 0.0
        %1039 = vmatprep.mubr.f32.mxu0 0.0
        %v1040 = vand.u32 %v479, 4294901760
        %1041 = vmatmul.mubr.f32.gmra.mrb[0].mxu0 %v1040
        %v1042 = vpop.f32.mrb[0].mxu0
        %v1043 = vadd.f32 %v917, %v1042
        %v1044 = vpop.f32.mrb[0].mxu0
        %v1045 = vadd.f32 %v919, %v1044
        %1046 = vdwg.mxu0
        %1047 = vmatprep.subr.mxu0 %v342
        %1048 = vmatpush1.msra.mxu0 %v341
        %1049 = vmatprep.subr.mxu0 %v344
        %1050 = vmatpush1.msra.mxu0 %v343
        %1051 = vmatprep.subr.mxu0 %v346
        %1052 = vmatpush1.msra.mxu0 %v345
        %1053 = vmatprep.subr.mxu0 %v348
        %1054 = vmatpush1.msra.mxu0 %v347
        %1055 = vmatprep.subr.mxu0 %v350
        %1056 = vmatpush1.msra.mxu0 %v349
        %1057 = vmatprep.subr.mxu0 %v352
        %1058 = vmatpush1.msra.mxu0 %v351
        %1059 = vmatprep.subr.mxu0 %v354
        %1060 = vmatpush1.msra.mxu0 %v353
        %1061 = vmatprep.subr.mxu0 %v356
        %1062 = vmatpush1.msra.mxu0 %v355
        %1063 = vmatprep.subr.mxu0 %v358
        %1064 = vmatpush1.msra.mxu0 %v357
        %1065 = vmatprep.subr.mxu0 %v360
        %1066 = vmatpush1.msra.mxu0 %v359
        %1067 = vmatprep.subr.mxu0 %v362
        %1068 = vmatpush1.msra.mxu0 %v361
        %1069 = vmatprep.subr.mxu0 %v364
        %1070 = vmatpush1.msra.mxu0 %v363
        %v1071 = vand.u32 %v486, 4294901760
        %1072 = vmatprep.subr.mxu0 %v1071
        %v1073 = vand.u32 %v483, 4294901760
        %1074 = vmatpush1.msra.mxu0 %v1073
        %1075 = vmatprep.subr.mxu0 0.0
        %1076 = vmatpush1.msra.mxu0 0.0
        %1077 = vmatprep.subr.mxu0 0.0
        %1078 = vmatpush1.msra.mxu0 0.0
        %1079 = vmatprep.subr.mxu0 0.0
        %1080 = vmatpush1.msra.mxu0 0.0
        %1081 = vmatprep.subr.mxu0 0.0
        %1082 = vmatpush1.msra.mxu0 0.0
        %1083 = vmatprep.subr.mxu0 0.0
        %1084 = vmatpush1.msra.mxu0 0.0
        %1085 = vmatprep.subr.mxu0 0.0
        %1086 = vmatpush1.msra.mxu0 0.0
        %1087 = vmatprep.subr.mxu0 0.0
        %1088 = vmatpush1.msra.mxu0 0.0
        %1089 = vmatprep.subr.mxu0 0.0
        %1090 = vmatpush1.msra.mxu0 0.0
        %1091 = vmatprep.subr.mxu0 0.0
        %1092 = vmatpush1.msra.mxu0 0.0
        %1093 = vmatprep.subr.mxu0 0.0
        %1094 = vmatpush1.msra.mxu0 0.0
        %1095 = vmatprep.subr.mxu0 0.0
        %1096 = vmatpush1.msra.mxu0 0.0
        %1097 = vmatprep.subr.mxu0 0.0
        %1098 = vmatpush1.msra.mxu0 0.0
        %1099 = vmatprep.subr.mxu0 0.0
        %1100 = vmatpush1.msra.mxu0 0.0
        %1101 = vmatprep.subr.mxu0 0.0
        %1102 = vmatpush1.msra.mxu0 0.0
        %1103 = vmatprep.subr.mxu0 0.0
        %1104 = vmatpush1.msra.mxu0 0.0
        %1105 = vmatprep.subr.mxu0 0.0
        %1106 = vmatpush1.msra.mxu0 0.0
        %1107 = vmatprep.subr.mxu0 0.0
        %1108 = vmatpush1.msra.mxu0 0.0
        %1109 = vmatprep.subr.mxu0 0.0
        %1110 = vmatpush1.msra.mxu0 0.0
        %1111 = vmatprep.subr.mxu0 0.0
        %1112 = vmatpush1.msra.mxu0 0.0
        %1113 = vmatprep.mubr.f32.mxu0 0.0
        %v1114 = vand.u32 %v479, 4294901760
        %1115 = vmatmul.mubr.f32.gmra.mrb[0].mxu0 %v1114
        %v1116 = vpop.f32.mrb[0].mxu0
        %v1117 = vadd.f32 %v1043, %v1116
        %v1118 = vpop.f32.mrb[0].mxu0
        %v1119 = vadd.f32 %v1045, %v1118
        %1120 = vdwg.mxu0
        %v1121 = vld [vmem:[#allocation8] sm:$0xff]
        %v1122 = vld [vmem:[#allocation8 + $0x8] sm:$0xff]
        %vm1123 = vcmask 588800
        %v1125 = vsel %vm1123, %v1122, 0
        %1127 = vmatprep.subr.mxu0 %v427
        %1128 = vmatpush1.msra.mxu0 %v426
        %1129 = vmatprep.subr.mxu0 %v429
        %1130 = vmatpush1.msra.mxu0 %v428
        %1131 = vmatprep.subr.mxu0 %v431
        %1132 = vmatpush1.msra.mxu0 %v430
        %1133 = vmatprep.subr.mxu0 %v433
        %1134 = vmatpush1.msra.mxu0 %v432
        %1135 = vmatprep.subr.mxu0 %v435
        %1136 = vmatpush1.msra.mxu0 %v434
        %1137 = vmatprep.subr.mxu0 %v437
        %1138 = vmatpush1.msra.mxu0 %v436
        %1139 = vmatprep.subr.mxu0 %v439
        %1140 = vmatpush1.msra.mxu0 %v438
        %1141 = vmatprep.subr.mxu0 %v441
        %1142 = vmatpush1.msra.mxu0 %v440
        %1143 = vmatprep.subr.mxu0 %v443
        %1144 = vmatpush1.msra.mxu0 %v442
        %1145 = vmatprep.subr.mxu0 %v445
        %1146 = vmatpush1.msra.mxu0 %v444
        %1147 = vmatprep.subr.mxu0 %v447
        %1148 = vmatpush1.msra.mxu0 %v446
        %1149 = vmatprep.subr.mxu0 %v449
        %1150 = vmatpush1.msra.mxu0 %v448
        %1151 = vmatprep.subr.mxu0 %v451
        %1152 = vmatpush1.msra.mxu0 %v450
        %1153 = vmatprep.subr.mxu0 %v453
        %1154 = vmatpush1.msra.mxu0 %v452
        %1155 = vmatprep.subr.mxu0 %v455
        %1156 = vmatpush1.msra.mxu0 %v454
        %1157 = vmatprep.subr.mxu0 %v457
        %1158 = vmatpush1.msra.mxu0 %v456
        %1159 = vmatprep.subr.mxu0 %v459
        %1160 = vmatpush1.msra.mxu0 %v458
        %1161 = vmatprep.subr.mxu0 %v461
        %1162 = vmatpush1.msra.mxu0 %v460
        %1163 = vmatprep.subr.mxu0 %v463
        %1164 = vmatpush1.msra.mxu0 %v462
        %1165 = vmatprep.subr.mxu0 %v465
        %1166 = vmatpush1.msra.mxu0 %v464
        %1167 = vmatprep.subr.mxu0 %v467
        %1168 = vmatpush1.msra.mxu0 %v466
        %1169 = vmatprep.subr.mxu0 %v469
        %1170 = vmatpush1.msra.mxu0 %v468
        %1171 = vmatprep.subr.mxu0 %v471
        %1172 = vmatpush1.msra.mxu0 %v470
        %1173 = vmatprep.subr.mxu0 %v473
        %1174 = vmatpush1.msra.mxu0 %v472
        %1175 = vmatprep.subr.mxu0 %v475
        %1176 = vmatpush1.msra.mxu0 %v474
        %1177 = vmatprep.subr.mxu0 0.0
        %1178 = vmatpush1.msra.mxu0 0.0
        %1179 = vmatprep.subr.mxu0 0.0
        %1180 = vmatpush1.msra.mxu0 0.0
        %1181 = vmatprep.subr.mxu0 0.0
        %1182 = vmatpush1.msra.mxu0 0.0
        %1183 = vmatprep.subr.mxu0 0.0
        %1184 = vmatpush1.msra.mxu0 0.0
        %1185 = vmatprep.subr.mxu0 0.0
        %1186 = vmatpush1.msra.mxu0 0.0
        %1187 = vmatprep.subr.mxu0 0.0
        %1188 = vmatpush1.msra.mxu0 0.0
        %1189 = vmatprep.subr.mxu0 0.0
        %1190 = vmatpush1.msra.mxu0 0.0
        %v1191 = vand.u32 %v1125, 4294901760
        %v1192 = vsub.f32 %v1125, %v1191
        %v1193 = vand.u32 %v1192, 4294901760
        %v1194 = vsub.f32 %v1192, %v1193
        %v1195 = vand.u32 %v1194, 4294901760
        %1196 = vmatprep.mubr.f32.mxu0 %v1195
        %v1197 = vand.u32 %v1121, 4294901760
        %v1198 = vsub.f32 %v1121, %v1197
        %v1199 = vand.u32 %v1198, 4294901760
        %v1200 = vsub.f32 %v1198, %v1199
        %v1201 = vand.u32 %v1200, 4294901760
        %1202 = vmatmul.mubr.f32.gmra.mrb[0].mxu0 %v1201
        %v1203 = vpop.f32.mrb[0].mxu0
        %v1204 = vadd.f32 0.0, %v1203
        %v1205 = vpop.f32.mrb[0].mxu0
        %v1206 = vadd.f32 0.0, %v1205
        %1207 = vdwg.mxu0
        %v1208 = vsub.f32 %v427, %v427
        %v1209 = vand.u32 %v1208, 4294901760
        %v1210 = vsub.f32 %v1208, %v1209
        %v1211 = vand.u32 %v1210, 4294901760
        %1212 = vmatprep.subr.mxu0 %v1211
        %v1213 = vsub.f32 %v426, %v426
        %v1214 = vand.u32 %v1213, 4294901760
        %v1215 = vsub.f32 %v1213, %v1214
        %v1216 = vand.u32 %v1215, 4294901760
        %1217 = vmatpush1.msra.mxu0 %v1216
        %v1218 = vsub.f32 %v429, %v429
        %v1219 = vand.u32 %v1218, 4294901760
        %v1220 = vsub.f32 %v1218, %v1219
        %v1221 = vand.u32 %v1220, 4294901760
        %1222 = vmatprep.subr.mxu0 %v1221
        %v1223 = vsub.f32 %v428, %v428
        %v1224 = vand.u32 %v1223, 4294901760
        %v1225 = vsub.f32 %v1223, %v1224
        %v1226 = vand.u32 %v1225, 4294901760
        %1227 = vmatpush1.msra.mxu0 %v1226
        %v1228 = vsub.f32 %v431, %v431
        %v1229 = vand.u32 %v1228, 4294901760
        %v1230 = vsub.f32 %v1228, %v1229
        %v1231 = vand.u32 %v1230, 4294901760
        %1232 = vmatprep.subr.mxu0 %v1231
        %v1233 = vsub.f32 %v430, %v430
        %v1234 = vand.u32 %v1233, 4294901760
        %v1235 = vsub.f32 %v1233, %v1234
        %v1236 = vand.u32 %v1235, 4294901760
        %1237 = vmatpush1.msra.mxu0 %v1236
        %v1238 = vsub.f32 %v433, %v433
        %v1239 = vand.u32 %v1238, 4294901760
        %v1240 = vsub.f32 %v1238, %v1239
        %v1241 = vand.u32 %v1240, 4294901760
        %1242 = vmatprep.subr.mxu0 %v1241
        %v1243 = vsub.f32 %v432, %v432
        %v1244 = vand.u32 %v1243, 4294901760
        %v1245 = vsub.f32 %v1243, %v1244
        %v1246 = vand.u32 %v1245, 4294901760
        %1247 = vmatpush1.msra.mxu0 %v1246
        %v1248 = vsub.f32 %v435, %v435
        %v1249 = vand.u32 %v1248, 4294901760
        %v1250 = vsub.f32 %v1248, %v1249
        %v1251 = vand.u32 %v1250, 4294901760
        %1252 = vmatprep.subr.mxu0 %v1251
        %v1253 = vsub.f32 %v434, %v434
        %v1254 = vand.u32 %v1253, 4294901760
        %v1255 = vsub.f32 %v1253, %v1254
        %v1256 = vand.u32 %v1255, 4294901760
        %1257 = vmatpush1.msra.mxu0 %v1256
        %v1258 = vsub.f32 %v437, %v437
        %v1259 = vand.u32 %v1258, 4294901760
        %v1260 = vsub.f32 %v1258, %v1259
        %v1261 = vand.u32 %v1260, 4294901760
        %1262 = vmatprep.subr.mxu0 %v1261
        %v1263 = vsub.f32 %v436, %v436
        %v1264 = vand.u32 %v1263, 4294901760
        %v1265 = vsub.f32 %v1263, %v1264
        %v1266 = vand.u32 %v1265, 4294901760
        %1267 = vmatpush1.msra.mxu0 %v1266
        %v1268 = vsub.f32 %v439, %v439
        %v1269 = vand.u32 %v1268, 4294901760
        %v1270 = vsub.f32 %v1268, %v1269
        %v1271 = vand.u32 %v1270, 4294901760
        %1272 = vmatprep.subr.mxu0 %v1271
        %v1273 = vsub.f32 %v438, %v438
        %v1274 = vand.u32 %v1273, 4294901760
        %v1275 = vsub.f32 %v1273, %v1274
        %v1276 = vand.u32 %v1275, 4294901760
        %1277 = vmatpush1.msra.mxu0 %v1276
        %v1278 = vsub.f32 %v441, %v441
        %v1279 = vand.u32 %v1278, 4294901760
        %v1280 = vsub.f32 %v1278, %v1279
        %v1281 = vand.u32 %v1280, 4294901760
        %1282 = vmatprep.subr.mxu0 %v1281
        %v1283 = vsub.f32 %v440, %v440
        %v1284 = vand.u32 %v1283, 4294901760
        %v1285 = vsub.f32 %v1283, %v1284
        %v1286 = vand.u32 %v1285, 4294901760
        %1287 = vmatpush1.msra.mxu0 %v1286
        %v1288 = vsub.f32 %v443, %v443
        %v1289 = vand.u32 %v1288, 4294901760
        %v1290 = vsub.f32 %v1288, %v1289
        %v1291 = vand.u32 %v1290, 4294901760
        %1292 = vmatprep.subr.mxu0 %v1291
        %v1293 = vsub.f32 %v442, %v442
        %v1294 = vand.u32 %v1293, 4294901760
        %v1295 = vsub.f32 %v1293, %v1294
        %v1296 = vand.u32 %v1295, 4294901760
        %1297 = vmatpush1.msra.mxu0 %v1296
        %v1298 = vsub.f32 %v445, %v445
        %v1299 = vand.u32 %v1298, 4294901760
        %v1300 = vsub.f32 %v1298, %v1299
        %v1301 = vand.u32 %v1300, 4294901760
        %1302 = vmatprep.subr.mxu0 %v1301
        %v1303 = vsub.f32 %v444, %v444
        %v1304 = vand.u32 %v1303, 4294901760
        %v1305 = vsub.f32 %v1303, %v1304
        %v1306 = vand.u32 %v1305, 4294901760
        %1307 = vmatpush1.msra.mxu0 %v1306
        %v1308 = vsub.f32 %v447, %v447
        %v1309 = vand.u32 %v1308, 4294901760
        %v1310 = vsub.f32 %v1308, %v1309
        %v1311 = vand.u32 %v1310, 4294901760
        %1312 = vmatprep.subr.mxu0 %v1311
        %v1313 = vsub.f32 %v446, %v446
        %v1314 = vand.u32 %v1313, 4294901760
        %v1315 = vsub.f32 %v1313, %v1314
        %v1316 = vand.u32 %v1315, 4294901760
        %1317 = vmatpush1.msra.mxu0 %v1316
        %v1318 = vsub.f32 %v449, %v449
        %v1319 = vand.u32 %v1318, 4294901760
        %v1320 = vsub.f32 %v1318, %v1319
        %v1321 = vand.u32 %v1320, 4294901760
        %1322 = vmatprep.subr.mxu0 %v1321
        %v1323 = vsub.f32 %v448, %v448
        %v1324 = vand.u32 %v1323, 4294901760
        %v1325 = vsub.f32 %v1323, %v1324
        %v1326 = vand.u32 %v1325, 4294901760
        %1327 = vmatpush1.msra.mxu0 %v1326
        %v1328 = vsub.f32 %v451, %v451
        %v1329 = vand.u32 %v1328, 4294901760
        %v1330 = vsub.f32 %v1328, %v1329
        %v1331 = vand.u32 %v1330, 4294901760
        %1332 = vmatprep.subr.mxu0 %v1331
        %v1333 = vsub.f32 %v450, %v450
        %v1334 = vand.u32 %v1333, 4294901760
        %v1335 = vsub.f32 %v1333, %v1334
        %v1336 = vand.u32 %v1335, 4294901760
        %1337 = vmatpush1.msra.mxu0 %v1336
        %v1338 = vsub.f32 %v453, %v453
        %v1339 = vand.u32 %v1338, 4294901760
        %v1340 = vsub.f32 %v1338, %v1339
        %v1341 = vand.u32 %v1340, 4294901760
        %1342 = vmatprep.subr.mxu0 %v1341
        %v1343 = vsub.f32 %v452, %v452
        %v1344 = vand.u32 %v1343, 4294901760
        %v1345 = vsub.f32 %v1343, %v1344
        %v1346 = vand.u32 %v1345, 4294901760
        %1347 = vmatpush1.msra.mxu0 %v1346
        %v1348 = vsub.f32 %v455, %v455
        %v1349 = vand.u32 %v1348, 4294901760
        %v1350 = vsub.f32 %v1348, %v1349
        %v1351 = vand.u32 %v1350, 4294901760
        %1352 = vmatprep.subr.mxu0 %v1351
        %v1353 = vsub.f32 %v454, %v454
        %v1354 = vand.u32 %v1353, 4294901760
        %v1355 = vsub.f32 %v1353, %v1354
        %v1356 = vand.u32 %v1355, 4294901760
        %1357 = vmatpush1.msra.mxu0 %v1356
        %v1358 = vsub.f32 %v457, %v457
        %v1359 = vand.u32 %v1358, 4294901760
        %v1360 = vsub.f32 %v1358, %v1359
        %v1361 = vand.u32 %v1360, 4294901760
        %1362 = vmatprep.subr.mxu0 %v1361
        %v1363 = vsub.f32 %v456, %v456
        %v1364 = vand.u32 %v1363, 4294901760
        %v1365 = vsub.f32 %v1363, %v1364
        %v1366 = vand.u32 %v1365, 4294901760
        %1367 = vmatpush1.msra.mxu0 %v1366
        %v1368 = vsub.f32 %v459, %v459
        %v1369 = vand.u32 %v1368, 4294901760
        %v1370 = vsub.f32 %v1368, %v1369
        %v1371 = vand.u32 %v1370, 4294901760
        %1372 = vmatprep.subr.mxu0 %v1371
        %v1373 = vsub.f32 %v458, %v458
        %v1374 = vand.u32 %v1373, 4294901760
        %v1375 = vsub.f32 %v1373, %v1374
        %v1376 = vand.u32 %v1375, 4294901760
        %1377 = vmatpush1.msra.mxu0 %v1376
        %v1378 = vsub.f32 %v461, %v461
        %v1379 = vand.u32 %v1378, 4294901760
        %v1380 = vsub.f32 %v1378, %v1379
        %v1381 = vand.u32 %v1380, 4294901760
        %1382 = vmatprep.subr.mxu0 %v1381
        %v1383 = vsub.f32 %v460, %v460
        %v1384 = vand.u32 %v1383, 4294901760
        %v1385 = vsub.f32 %v1383, %v1384
        %v1386 = vand.u32 %v1385, 4294901760
        %1387 = vmatpush1.msra.mxu0 %v1386
        %v1388 = vsub.f32 %v463, %v463
        %v1389 = vand.u32 %v1388, 4294901760
        %v1390 = vsub.f32 %v1388, %v1389
        %v1391 = vand.u32 %v1390, 4294901760
        %1392 = vmatprep.subr.mxu0 %v1391
        %v1393 = vsub.f32 %v462, %v462
        %v1394 = vand.u32 %v1393, 4294901760
        %v1395 = vsub.f32 %v1393, %v1394
        %v1396 = vand.u32 %v1395, 4294901760
        %1397 = vmatpush1.msra.mxu0 %v1396
        %v1398 = vsub.f32 %v465, %v465
        %v1399 = vand.u32 %v1398, 4294901760
        %v1400 = vsub.f32 %v1398, %v1399
        %v1401 = vand.u32 %v1400, 4294901760
        %1402 = vmatprep.subr.mxu0 %v1401
        %v1403 = vsub.f32 %v464, %v464
        %v1404 = vand.u32 %v1403, 4294901760
        %v1405 = vsub.f32 %v1403, %v1404
        %v1406 = vand.u32 %v1405, 4294901760
        %1407 = vmatpush1.msra.mxu0 %v1406
        %v1408 = vsub.f32 %v467, %v467
        %v1409 = vand.u32 %v1408, 4294901760
        %v1410 = vsub.f32 %v1408, %v1409
        %v1411 = vand.u32 %v1410, 4294901760
        %1412 = vmatprep.subr.mxu0 %v1411
        %v1413 = vsub.f32 %v466, %v466
        %v1414 = vand.u32 %v1413, 4294901760
        %v1415 = vsub.f32 %v1413, %v1414
        %v1416 = vand.u32 %v1415, 4294901760
        %1417 = vmatpush1.msra.mxu0 %v1416
        %v1418 = vsub.f32 %v469, %v469
        %v1419 = vand.u32 %v1418, 4294901760
        %v1420 = vsub.f32 %v1418, %v1419
        %v1421 = vand.u32 %v1420, 4294901760
        %1422 = vmatprep.subr.mxu0 %v1421
        %v1423 = vsub.f32 %v468, %v468
        %v1424 = vand.u32 %v1423, 4294901760
        %v1425 = vsub.f32 %v1423, %v1424
        %v1426 = vand.u32 %v1425, 4294901760
        %1427 = vmatpush1.msra.mxu0 %v1426
        %v1428 = vsub.f32 %v471, %v471
        %v1429 = vand.u32 %v1428, 4294901760
        %v1430 = vsub.f32 %v1428, %v1429
        %v1431 = vand.u32 %v1430, 4294901760
        %1432 = vmatprep.subr.mxu0 %v1431
        %v1433 = vsub.f32 %v470, %v470
        %v1434 = vand.u32 %v1433, 4294901760
        %v1435 = vsub.f32 %v1433, %v1434
        %v1436 = vand.u32 %v1435, 4294901760
        %1437 = vmatpush1.msra.mxu0 %v1436
        %v1438 = vsub.f32 %v473, %v473
        %v1439 = vand.u32 %v1438, 4294901760
        %v1440 = vsub.f32 %v1438, %v1439
        %v1441 = vand.u32 %v1440, 4294901760
        %1442 = vmatprep.subr.mxu0 %v1441
        %v1443 = vsub.f32 %v472, %v472
        %v1444 = vand.u32 %v1443, 4294901760
        %v1445 = vsub.f32 %v1443, %v1444
        %v1446 = vand.u32 %v1445, 4294901760
        %1447 = vmatpush1.msra.mxu0 %v1446
        %v1448 = vsub.f32 %v475, %v475
        %v1449 = vand.u32 %v1448, 4294901760
        %v1450 = vsub.f32 %v1448, %v1449
        %v1451 = vand.u32 %v1450, 4294901760
        %1452 = vmatprep.subr.mxu0 %v1451
        %v1453 = vsub.f32 %v474, %v474
        %v1454 = vand.u32 %v1453, 4294901760
        %v1455 = vsub.f32 %v1453, %v1454
        %v1456 = vand.u32 %v1455, 4294901760
        %1457 = vmatpush1.msra.mxu0 %v1456
        %1458 = vmatprep.subr.mxu0 0.0
        %1459 = vmatpush1.msra.mxu0 0.0
        %1460 = vmatprep.subr.mxu0 0.0
        %1461 = vmatpush1.msra.mxu0 0.0
        %1462 = vmatprep.subr.mxu0 0.0
        %1463 = vmatpush1.msra.mxu0 0.0
        %1464 = vmatprep.subr.mxu0 0.0
        %1465 = vmatpush1.msra.mxu0 0.0
        %1466 = vmatprep.subr.mxu0 0.0
        %1467 = vmatpush1.msra.mxu0 0.0
        %1468 = vmatprep.subr.mxu0 0.0
        %1469 = vmatpush1.msra.mxu0 0.0
        %1470 = vmatprep.subr.mxu0 0.0
        %1471 = vmatpush1.msra.mxu0 0.0
        %v1472 = vand.u32 %v1125, 4294901760
        %1473 = vmatprep.mubr.f32.mxu0 %v1472
        %v1474 = vand.u32 %v1121, 4294901760
        %1475 = vmatmul.mubr.f32.gmra.mrb[0].mxu0 %v1474
        %v1476 = vpop.f32.mrb[0].mxu0
        %v1477 = vadd.f32 %v1204, %v1476
        %v1478 = vpop.f32.mrb[0].mxu0
        %v1479 = vadd.f32 %v1206, %v1478
        %1480 = vdwg.mxu0
        %v1481 = vsub.f32 %v427, %v427
        %1482 = vmatprep.subr.mxu0 %v1481
        %v1483 = vsub.f32 %v426, %v426
        %1484 = vmatpush1.msra.mxu0 %v1483
        %v1485 = vsub.f32 %v429, %v429
        %1486 = vmatprep.subr.mxu0 %v1485
        %v1487 = vsub.f32 %v428, %v428
        %1488 = vmatpush1.msra.mxu0 %v1487
        %v1489 = vsub.f32 %v431, %v431
        %1490 = vmatprep.subr.mxu0 %v1489
        %v1491 = vsub.f32 %v430, %v430
        %1492 = vmatpush1.msra.mxu0 %v1491
        %v1493 = vsub.f32 %v433, %v433
        %1494 = vmatprep.subr.mxu0 %v1493
        %v1495 = vsub.f32 %v432, %v432
        %1496 = vmatpush1.msra.mxu0 %v1495
        %v1497 = vsub.f32 %v435, %v435
        %1498 = vmatprep.subr.mxu0 %v1497
        %v1499 = vsub.f32 %v434, %v434
        %1500 = vmatpush1.msra.mxu0 %v1499
        %v1501 = vsub.f32 %v437, %v437
        %1502 = vmatprep.subr.mxu0 %v1501
        %v1503 = vsub.f32 %v436, %v436
        %1504 = vmatpush1.msra.mxu0 %v1503
        %v1505 = vsub.f32 %v439, %v439
        %1506 = vmatprep.subr.mxu0 %v1505
        %v1507 = vsub.f32 %v438, %v438
        %1508 = vmatpush1.msra.mxu0 %v1507
        %v1509 = vsub.f32 %v441, %v441
        %1510 = vmatprep.subr.mxu0 %v1509
        %v1511 = vsub.f32 %v440, %v440
        %1512 = vmatpush1.msra.mxu0 %v1511
        %v1513 = vsub.f32 %v443, %v443
        %1514 = vmatprep.subr.mxu0 %v1513
        %v1515 = vsub.f32 %v442, %v442
        %1516 = vmatpush1.msra.mxu0 %v1515
        %v1517 = vsub.f32 %v445, %v445
        %1518 = vmatprep.subr.mxu0 %v1517
        %v1519 = vsub.f32 %v444, %v444
        %1520 = vmatpush1.msra.mxu0 %v1519
        %v1521 = vsub.f32 %v447, %v447
        %1522 = vmatprep.subr.mxu0 %v1521
        %v1523 = vsub.f32 %v446, %v446
        %1524 = vmatpush1.msra.mxu0 %v1523
        %v1525 = vsub.f32 %v449, %v449
        %1526 = vmatprep.subr.mxu0 %v1525
        %v1527 = vsub.f32 %v448, %v448
        %1528 = vmatpush1.msra.mxu0 %v1527
        %v1529 = vsub.f32 %v451, %v451
        %1530 = vmatprep.subr.mxu0 %v1529
        %v1531 = vsub.f32 %v450, %v450
        %1532 = vmatpush1.msra.mxu0 %v1531
        %v1533 = vsub.f32 %v453, %v453
        %1534 = vmatprep.subr.mxu0 %v1533
        %v1535 = vsub.f32 %v452, %v452
        %1536 = vmatpush1.msra.mxu0 %v1535
        %v1537 = vsub.f32 %v455, %v455
        %1538 = vmatprep.subr.mxu0 %v1537
        %v1539 = vsub.f32 %v454, %v454
        %1540 = vmatpush1.msra.mxu0 %v1539
        %v1541 = vsub.f32 %v457, %v457
        %1542 = vmatprep.subr.mxu0 %v1541
        %v1543 = vsub.f32 %v456, %v456
        %1544 = vmatpush1.msra.mxu0 %v1543
        %v1545 = vsub.f32 %v459, %v459
        %1546 = vmatprep.subr.mxu0 %v1545
        %v1547 = vsub.f32 %v458, %v458
        %1548 = vmatpush1.msra.mxu0 %v1547
        %v1549 = vsub.f32 %v461, %v461
        %1550 = vmatprep.subr.mxu0 %v1549
        %v1551 = vsub.f32 %v460, %v460
        %1552 = vmatpush1.msra.mxu0 %v1551
        %v1553 = vsub.f32 %v463, %v463
        %1554 = vmatprep.subr.mxu0 %v1553
        %v1555 = vsub.f32 %v462, %v462
        %1556 = vmatpush1.msra.mxu0 %v1555
        %v1557 = vsub.f32 %v465, %v465
        %1558 = vmatprep.subr.mxu0 %v1557
        %v1559 = vsub.f32 %v464, %v464
        %1560 = vmatpush1.msra.mxu0 %v1559
        %v1561 = vsub.f32 %v467, %v467
        %1562 = vmatprep.subr.mxu0 %v1561
        %v1563 = vsub.f32 %v466, %v466
        %1564 = vmatpush1.msra.mxu0 %v1563
        %v1565 = vsub.f32 %v469, %v469
        %1566 = vmatprep.subr.mxu0 %v1565
        %v1567 = vsub.f32 %v468, %v468
        %1568 = vmatpush1.msra.mxu0 %v1567
        %v1569 = vsub.f32 %v471, %v471
        %1570 = vmatprep.subr.mxu0 %v1569
        %v1571 = vsub.f32 %v470, %v470
        %1572 = vmatpush1.msra.mxu0 %v1571
        %v1573 = vsub.f32 %v473, %v473
        %1574 = vmatprep.subr.mxu0 %v1573
        %v1575 = vsub.f32 %v472, %v472
        %1576 = vmatpush1.msra.mxu0 %v1575
        %v1577 = vsub.f32 %v475, %v475
        %1578 = vmatprep.subr.mxu0 %v1577
        %v1579 = vsub.f32 %v474, %v474
        %1580 = vmatpush1.msra.mxu0 %v1579
        %1581 = vmatprep.subr.mxu0 0.0
        %1582 = vmatpush1.msra.mxu0 0.0
        %1583 = vmatprep.subr.mxu0 0.0
        %1584 = vmatpush1.msra.mxu0 0.0
        %1585 = vmatprep.subr.mxu0 0.0
        %1586 = vmatpush1.msra.mxu0 0.0
        %1587 = vmatprep.subr.mxu0 0.0
        %1588 = vmatpush1.msra.mxu0 0.0
        %1589 = vmatprep.subr.mxu0 0.0
        %1590 = vmatpush1.msra.mxu0 0.0
        %1591 = vmatprep.subr.mxu0 0.0
        %1592 = vmatpush1.msra.mxu0 0.0
        %1593 = vmatprep.subr.mxu0 0.0
        %1594 = vmatpush1.msra.mxu0 0.0
        %v1595 = vand.u32 %v1125, 4294901760
        %v1596 = vsub.f32 %v1125, %v1595
        %1597 = vmatprep.mubr.f32.mxu0 %v1596
        %v1598 = vand.u32 %v1121, 4294901760
        %v1599 = vsub.f32 %v1121, %v1598
        %1600 = vmatmul.mubr.f32.gmra.mrb[0].mxu0 %v1599
        %v1601 = vpop.f32.mrb[0].mxu0
        %v1602 = vadd.f32 %v1477, %v1601
        %v1603 = vpop.f32.mrb[0].mxu0
        %v1604 = vadd.f32 %v1479, %v1603
        %1605 = vdwg.mxu0
        %1606 = vmatprep.subr.mxu0 %v427
        %1607 = vmatpush1.msra.mxu0 %v426
        %1608 = vmatprep.subr.mxu0 %v429
        %1609 = vmatpush1.msra.mxu0 %v428
        %1610 = vmatprep.subr.mxu0 %v431
        %1611 = vmatpush1.msra.mxu0 %v430
        %1612 = vmatprep.subr.mxu0 %v433
        %1613 = vmatpush1.msra.mxu0 %v432
        %1614 = vmatprep.subr.mxu0 %v435
        %1615 = vmatpush1.msra.mxu0 %v434
        %1616 = vmatprep.subr.mxu0 %v437
        %1617 = vmatpush1.msra.mxu0 %v436
        %1618 = vmatprep.subr.mxu0 %v439
        %1619 = vmatpush1.msra.mxu0 %v438
        %1620 = vmatprep.subr.mxu0 %v441
        %1621 = vmatpush1.msra.mxu0 %v440
        %1622 = vmatprep.subr.mxu0 %v443
        %1623 = vmatpush1.msra.mxu0 %v442
        %1624 = vmatprep.subr.mxu0 %v445
        %1625 = vmatpush1.msra.mxu0 %v444
        %1626 = vmatprep.subr.mxu0 %v447
        %1627 = vmatpush1.msra.mxu0 %v446
        %1628 = vmatprep.subr.mxu0 %v449
        %1629 = vmatpush1.msra.mxu0 %v448
        %1630 = vmatprep.subr.mxu0 %v451
        %1631 = vmatpush1.msra.mxu0 %v450
        %1632 = vmatprep.subr.mxu0 %v453
        %1633 = vmatpush1.msra.mxu0 %v452
        %1634 = vmatprep.subr.mxu0 %v455
        %1635 = vmatpush1.msra.mxu0 %v454
        %1636 = vmatprep.subr.mxu0 %v457
        %1637 = vmatpush1.msra.mxu0 %v456
        %1638 = vmatprep.subr.mxu0 %v459
        %1639 = vmatpush1.msra.mxu0 %v458
        %1640 = vmatprep.subr.mxu0 %v461
        %1641 = vmatpush1.msra.mxu0 %v460
        %1642 = vmatprep.subr.mxu0 %v463
        %1643 = vmatpush1.msra.mxu0 %v462
        %1644 = vmatprep.subr.mxu0 %v465
        %1645 = vmatpush1.msra.mxu0 %v464
        %1646 = vmatprep.subr.mxu0 %v467
        %1647 = vmatpush1.msra.mxu0 %v466
        %1648 = vmatprep.subr.mxu0 %v469
        %1649 = vmatpush1.msra.mxu0 %v468
        %1650 = vmatprep.subr.mxu0 %v471
        %1651 = vmatpush1.msra.mxu0 %v470
        %1652 = vmatprep.subr.mxu0 %v473
        %1653 = vmatpush1.msra.mxu0 %v472
        %1654 = vmatprep.subr.mxu0 %v475
        %1655 = vmatpush1.msra.mxu0 %v474
        %1656 = vmatprep.subr.mxu0 0.0
        %1657 = vmatpush1.msra.mxu0 0.0
        %1658 = vmatprep.subr.mxu0 0.0
        %1659 = vmatpush1.msra.mxu0 0.0
        %1660 = vmatprep.subr.mxu0 0.0
        %1661 = vmatpush1.msra.mxu0 0.0
        %1662 = vmatprep.subr.mxu0 0.0
        %1663 = vmatpush1.msra.mxu0 0.0
        %1664 = vmatprep.subr.mxu0 0.0
        %1665 = vmatpush1.msra.mxu0 0.0
        %1666 = vmatprep.subr.mxu0 0.0
        %1667 = vmatpush1.msra.mxu0 0.0
        %1668 = vmatprep.subr.mxu0 0.0
        %1669 = vmatpush1.msra.mxu0 0.0
        %v1670 = vand.u32 %v1125, 4294901760
        %v1671 = vsub.f32 %v1125, %v1670
        %v1672 = vand.u32 %v1671, 4294901760
        %1673 = vmatprep.mubr.f32.mxu0 %v1672
        %v1674 = vand.u32 %v1121, 4294901760
        %v1675 = vsub.f32 %v1121, %v1674
        %v1676 = vand.u32 %v1675, 4294901760
        %1677 = vmatmul.mubr.f32.gmra.mrb[0].mxu0 %v1676
        %v1678 = vpop.f32.mrb[0].mxu0
        %v1679 = vadd.f32 %v1602, %v1678
        %v1680 = vpop.f32.mrb[0].mxu0
        %v1681 = vadd.f32 %v1604, %v1680
        %1682 = vdwg.mxu0
        %v1683 = vsub.f32 %v427, %v427
        %v1684 = vand.u32 %v1683, 4294901760
        %1685 = vmatprep.subr.mxu0 %v1684
        %v1686 = vsub.f32 %v426, %v426
        %v1687 = vand.u32 %v1686, 4294901760
        %1688 = vmatpush1.msra.mxu0 %v1687
        %v1689 = vsub.f32 %v429, %v429
        %v1690 = vand.u32 %v1689, 4294901760
        %1691 = vmatprep.subr.mxu0 %v1690
        %v1692 = vsub.f32 %v428, %v428
        %v1693 = vand.u32 %v1692, 4294901760
        %1694 = vmatpush1.msra.mxu0 %v1693
        %v1695 = vsub.f32 %v431, %v431
        %v1696 = vand.u32 %v1695, 4294901760
        %1697 = vmatprep.subr.mxu0 %v1696
        %v1698 = vsub.f32 %v430, %v430
        %v1699 = vand.u32 %v1698, 4294901760
        %1700 = vmatpush1.msra.mxu0 %v1699
        %v1701 = vsub.f32 %v433, %v433
        %v1702 = vand.u32 %v1701, 4294901760
        %1703 = vmatprep.subr.mxu0 %v1702
        %v1704 = vsub.f32 %v432, %v432
        %v1705 = vand.u32 %v1704, 4294901760
        %1706 = vmatpush1.msra.mxu0 %v1705
        %v1707 = vsub.f32 %v435, %v435
        %v1708 = vand.u32 %v1707, 4294901760
        %1709 = vmatprep.subr.mxu0 %v1708
        %v1710 = vsub.f32 %v434, %v434
        %v1711 = vand.u32 %v1710, 4294901760
        %1712 = vmatpush1.msra.mxu0 %v1711
        %v1713 = vsub.f32 %v437, %v437
        %v1714 = vand.u32 %v1713, 4294901760
        %1715 = vmatprep.subr.mxu0 %v1714
        %v1716 = vsub.f32 %v436, %v436
        %v1717 = vand.u32 %v1716, 4294901760
        %1718 = vmatpush1.msra.mxu0 %v1717
        %v1719 = vsub.f32 %v439, %v439
        %v1720 = vand.u32 %v1719, 4294901760
        %1721 = vmatprep.subr.mxu0 %v1720
        %v1722 = vsub.f32 %v438, %v438
        %v1723 = vand.u32 %v1722, 4294901760
        %1724 = vmatpush1.msra.mxu0 %v1723
        %v1725 = vsub.f32 %v441, %v441
        %v1726 = vand.u32 %v1725, 4294901760
        %1727 = vmatprep.subr.mxu0 %v1726
        %v1728 = vsub.f32 %v440, %v440
        %v1729 = vand.u32 %v1728, 4294901760
        %1730 = vmatpush1.msra.mxu0 %v1729
        %v1731 = vsub.f32 %v443, %v443
        %v1732 = vand.u32 %v1731, 4294901760
        %1733 = vmatprep.subr.mxu0 %v1732
        %v1734 = vsub.f32 %v442, %v442
        %v1735 = vand.u32 %v1734, 4294901760
        %1736 = vmatpush1.msra.mxu0 %v1735
        %v1737 = vsub.f32 %v445, %v445
        %v1738 = vand.u32 %v1737, 4294901760
        %1739 = vmatprep.subr.mxu0 %v1738
        %v1740 = vsub.f32 %v444, %v444
        %v1741 = vand.u32 %v1740, 4294901760
        %1742 = vmatpush1.msra.mxu0 %v1741
        %v1743 = vsub.f32 %v447, %v447
        %v1744 = vand.u32 %v1743, 4294901760
        %1745 = vmatprep.subr.mxu0 %v1744
        %v1746 = vsub.f32 %v446, %v446
        %v1747 = vand.u32 %v1746, 4294901760
        %1748 = vmatpush1.msra.mxu0 %v1747
        %v1749 = vsub.f32 %v449, %v449
        %v1750 = vand.u32 %v1749, 4294901760
        %1751 = vmatprep.subr.mxu0 %v1750
        %v1752 = vsub.f32 %v448, %v448
        %v1753 = vand.u32 %v1752, 4294901760
        %1754 = vmatpush1.msra.mxu0 %v1753
        %v1755 = vsub.f32 %v451, %v451
        %v1756 = vand.u32 %v1755, 4294901760
        %1757 = vmatprep.subr.mxu0 %v1756
        %v1758 = vsub.f32 %v450, %v450
        %v1759 = vand.u32 %v1758, 4294901760
        %1760 = vmatpush1.msra.mxu0 %v1759
        %v1761 = vsub.f32 %v453, %v453
        %v1762 = vand.u32 %v1761, 4294901760
        %1763 = vmatprep.subr.mxu0 %v1762
        %v1764 = vsub.f32 %v452, %v452
        %v1765 = vand.u32 %v1764, 4294901760
        %1766 = vmatpush1.msra.mxu0 %v1765
        %v1767 = vsub.f32 %v455, %v455
        %v1768 = vand.u32 %v1767, 4294901760
        %1769 = vmatprep.subr.mxu0 %v1768
        %v1770 = vsub.f32 %v454, %v454
        %v1771 = vand.u32 %v1770, 4294901760
        %1772 = vmatpush1.msra.mxu0 %v1771
        %v1773 = vsub.f32 %v457, %v457
        %v1774 = vand.u32 %v1773, 4294901760
        %1775 = vmatprep.subr.mxu0 %v1774
        %v1776 = vsub.f32 %v456, %v456
        %v1777 = vand.u32 %v1776, 4294901760
        %1778 = vmatpush1.msra.mxu0 %v1777
        %v1779 = vsub.f32 %v459, %v459
        %v1780 = vand.u32 %v1779, 4294901760
        %1781 = vmatprep.subr.mxu0 %v1780
        %v1782 = vsub.f32 %v458, %v458
        %v1783 = vand.u32 %v1782, 4294901760
        %1784 = vmatpush1.msra.mxu0 %v1783
        %v1785 = vsub.f32 %v461, %v461
        %v1786 = vand.u32 %v1785, 4294901760
        %1787 = vmatprep.subr.mxu0 %v1786
        %v1788 = vsub.f32 %v460, %v460
        %v1789 = vand.u32 %v1788, 4294901760
        %1790 = vmatpush1.msra.mxu0 %v1789
        %v1791 = vsub.f32 %v463, %v463
        %v1792 = vand.u32 %v1791, 4294901760
        %1793 = vmatprep.subr.mxu0 %v1792
        %v1794 = vsub.f32 %v462, %v462
        %v1795 = vand.u32 %v1794, 4294901760
        %1796 = vmatpush1.msra.mxu0 %v1795
        %v1797 = vsub.f32 %v465, %v465
        %v1798 = vand.u32 %v1797, 4294901760
        %1799 = vmatprep.subr.mxu0 %v1798
        %v1800 = vsub.f32 %v464, %v464
        %v1801 = vand.u32 %v1800, 4294901760
        %1802 = vmatpush1.msra.mxu0 %v1801
        %v1803 = vsub.f32 %v467, %v467
        %v1804 = vand.u32 %v1803, 4294901760
        %1805 = vmatprep.subr.mxu0 %v1804
        %v1806 = vsub.f32 %v466, %v466
        %v1807 = vand.u32 %v1806, 4294901760
        %1808 = vmatpush1.msra.mxu0 %v1807
        %v1809 = vsub.f32 %v469, %v469
        %v1810 = vand.u32 %v1809, 4294901760
        %1811 = vmatprep.subr.mxu0 %v1810
        %v1812 = vsub.f32 %v468, %v468
        %v1813 = vand.u32 %v1812, 4294901760
        %1814 = vmatpush1.msra.mxu0 %v1813
        %v1815 = vsub.f32 %v471, %v471
        %v1816 = vand.u32 %v1815, 4294901760
        %1817 = vmatprep.subr.mxu0 %v1816
        %v1818 = vsub.f32 %v470, %v470
        %v1819 = vand.u32 %v1818, 4294901760
        %1820 = vmatpush1.msra.mxu0 %v1819
        %v1821 = vsub.f32 %v473, %v473
        %v1822 = vand.u32 %v1821, 4294901760
        %1823 = vmatprep.subr.mxu0 %v1822
        %v1824 = vsub.f32 %v472, %v472
        %v1825 = vand.u32 %v1824, 4294901760
        %1826 = vmatpush1.msra.mxu0 %v1825
        %v1827 = vsub.f32 %v475, %v475
        %v1828 = vand.u32 %v1827, 4294901760
        %1829 = vmatprep.subr.mxu0 %v1828
        %v1830 = vsub.f32 %v474, %v474
        %v1831 = vand.u32 %v1830, 4294901760
        %1832 = vmatpush1.msra.mxu0 %v1831
        %1833 = vmatprep.subr.mxu0 0.0
        %1834 = vmatpush1.msra.mxu0 0.0
        %1835 = vmatprep.subr.mxu0 0.0
        %1836 = vmatpush1.msra.mxu0 0.0
        %1837 = vmatprep.subr.mxu0 0.0
        %1838 = vmatpush1.msra.mxu0 0.0
        %1839 = vmatprep.subr.mxu0 0.0
        %1840 = vmatpush1.msra.mxu0 0.0
        %1841 = vmatprep.subr.mxu0 0.0
        %1842 = vmatpush1.msra.mxu0 0.0
        %1843 = vmatprep.subr.mxu0 0.0
        %1844 = vmatpush1.msra.mxu0 0.0
        %1845 = vmatprep.subr.mxu0 0.0
        %1846 = vmatpush1.msra.mxu0 0.0
        %v1847 = vand.u32 %v1125, 4294901760
        %1848 = vmatprep.mubr.f32.mxu0 %v1847
        %v1849 = vand.u32 %v1121, 4294901760
        %1850 = vmatmul.mubr.f32.gmra.mrb[0].mxu0 %v1849
        %v1851 = vpop.f32.mrb[0].mxu0
        %v1852 = vadd.f32 %v1679, %v1851
        %v1853 = vpop.f32.mrb[0].mxu0
        %v1854 = vadd.f32 %v1681, %v1853
        %1855 = vdwg.mxu0
        %1856 = vmatprep.subr.mxu0 %v427
        %1857 = vmatpush1.msra.mxu0 %v426
        %1858 = vmatprep.subr.mxu0 %v429
        %1859 = vmatpush1.msra.mxu0 %v428
        %1860 = vmatprep.subr.mxu0 %v431
        %1861 = vmatpush1.msra.mxu0 %v430
        %1862 = vmatprep.subr.mxu0 %v433
        %1863 = vmatpush1.msra.mxu0 %v432
        %1864 = vmatprep.subr.mxu0 %v435
        %1865 = vmatpush1.msra.mxu0 %v434
        %1866 = vmatprep.subr.mxu0 %v437
        %1867 = vmatpush1.msra.mxu0 %v436
        %1868 = vmatprep.subr.mxu0 %v439
        %1869 = vmatpush1.msra.mxu0 %v438
        %1870 = vmatprep.subr.mxu0 %v441
        %1871 = vmatpush1.msra.mxu0 %v440
        %1872 = vmatprep.subr.mxu0 %v443
        %1873 = vmatpush1.msra.mxu0 %v442
        %1874 = vmatprep.subr.mxu0 %v445
        %1875 = vmatpush1.msra.mxu0 %v444
        %1876 = vmatprep.subr.mxu0 %v447
        %1877 = vmatpush1.msra.mxu0 %v446
        %1878 = vmatprep.subr.mxu0 %v449
        %1879 = vmatpush1.msra.mxu0 %v448
        %1880 = vmatprep.subr.mxu0 %v451
        %1881 = vmatpush1.msra.mxu0 %v450
        %1882 = vmatprep.subr.mxu0 %v453
        %1883 = vmatpush1.msra.mxu0 %v452
        %1884 = vmatprep.subr.mxu0 %v455
        %1885 = vmatpush1.msra.mxu0 %v454
        %1886 = vmatprep.subr.mxu0 %v457
        %1887 = vmatpush1.msra.mxu0 %v456
        %1888 = vmatprep.subr.mxu0 %v459
        %1889 = vmatpush1.msra.mxu0 %v458
        %1890 = vmatprep.subr.mxu0 %v461
        %1891 = vmatpush1.msra.mxu0 %v460
        %1892 = vmatprep.subr.mxu0 %v463
        %1893 = vmatpush1.msra.mxu0 %v462
        %1894 = vmatprep.subr.mxu0 %v465
        %1895 = vmatpush1.msra.mxu0 %v464
        %1896 = vmatprep.subr.mxu0 %v467
        %1897 = vmatpush1.msra.mxu0 %v466
        %1898 = vmatprep.subr.mxu0 %v469
        %1899 = vmatpush1.msra.mxu0 %v468
        %1900 = vmatprep.subr.mxu0 %v471
        %1901 = vmatpush1.msra.mxu0 %v470
        %1902 = vmatprep.subr.mxu0 %v473
        %1903 = vmatpush1.msra.mxu0 %v472
        %1904 = vmatprep.subr.mxu0 %v475
        %1905 = vmatpush1.msra.mxu0 %v474
        %1906 = vmatprep.subr.mxu0 0.0
        %1907 = vmatpush1.msra.mxu0 0.0
        %1908 = vmatprep.subr.mxu0 0.0
        %1909 = vmatpush1.msra.mxu0 0.0
        %1910 = vmatprep.subr.mxu0 0.0
        %1911 = vmatpush1.msra.mxu0 0.0
        %1912 = vmatprep.subr.mxu0 0.0
        %1913 = vmatpush1.msra.mxu0 0.0
        %1914 = vmatprep.subr.mxu0 0.0
        %1915 = vmatpush1.msra.mxu0 0.0
        %1916 = vmatprep.subr.mxu0 0.0
        %1917 = vmatpush1.msra.mxu0 0.0
        %1918 = vmatprep.subr.mxu0 0.0
        %1919 = vmatpush1.msra.mxu0 0.0
        %v1920 = vand.u32 %v1125, 4294901760
        %1921 = vmatprep.mubr.f32.mxu0 %v1920
        %v1922 = vand.u32 %v1121, 4294901760
        %1923 = vmatmul.mubr.f32.gmra.mrb[0].mxu0 %v1922
        %v1924 = vpop.f32.mrb[0].mxu0
        %v1925 = vadd.f32 %v1852, %v1924
        %v1926 = vpop.f32.mrb[0].mxu0
        %v1927 = vadd.f32 %v1854, %v1926
        %1928 = vdwg.mxu0
        %v1929 = vmul.f32 %v1117, %v1925
        %v1930 = vmul.f32 %v1119, %v1927
        %v1931 = vrot.slane %v1929, 4
        %v1932 = vadd.f32 %v1929, %v1931
        %v1933 = vrot.slane %v1932, 2
        %v1934 = vadd.f32 %v1932, %v1933
        %v1935 = vrot.slane %v1934, 1
        %v1936 = vadd.f32 %v1934, %v1935
        %v1937 = vrot.slane %v1930, 4
        %v1938 = vadd.f32 %v1930, %v1937
        %v1939 = vrot.slane %v1938, 2
        %v1940 = vadd.f32 %v1938, %v1939
        %v1941 = vrot.slane %v1940, 1
        %v1942 = vadd.f32 %v1940, %v1941
        %v1945 = vcombine.low %v1936, %v1942
        %v1947 = vunpack.c.l.s4 1966171168
        %v1948 = vunpack.c.0.s8 %v1947
        %v1949 = vlaneseq
        %v1950 = vshrl.u32 %v1949, 7
        %v1951 = vsub.s32 %v1948, %v1950
        %v1952 = vrot.slane %v1945, %v1951
        %v1954 = vunpack.c.l.s4 1966171168
        %v1955 = vunpack.c.0.s8 %v1954
        %v1956 = vlaneseq
        %v1957 = vshrl.u32 %v1956, 7
        %v1958 = vsub.s32 %v1955, %v1957
        %v1959 = vrot.slane %v1952, %v1958
        %v1961 = vlaneseq
        %vm1962 = vcmp.ge.s32.totalorder %v1961, 0
        %vm1963 = vcmp.lt.s32.totalorder %v1961, 256
        %vm1964 = vmand %vm1962, %vm1963
        %1965 = vst.msk [vmem:[%s276] sm:$0x3] %vm1964, %v1959
        %s1966 = sand.u32 %s127, 1
        %s1967 = scalar_lea.sflag [#allocation4], %s1966
        %s1968 = sand.u32 %s127, 1
        %s1969 = smul.addr %s1968, 2
        %s1970 = scalar_lea.vmem [#allocation10], %s1969
        // Predicated region
        $region53: #{tpu_custom_call.1} parent=35 // pred_check
          %p1971 = pneg %p137
        $region54: #{tpu_custom_call.1} parent=35 // pred_check_branch
          %1973 = sbr.rel (%p1971) target = $region56
        $region55: #{tpu_custom_call.1} parent=35 // pred_region
          %s1974 = smul.u32 2, %s25
          %s1976 = ssub.s32 32, 32
          %1977 = vsyncadd %s1967, %s1976
          %s1978 = smul.addr %s1974, 16
          %s1979 = scalar_lea.hbm %s4, %s1978
          %s1981 = sshll.u32 %s1970, 4
          %s1982 = int_to_ptr.vmem [resolvable:$true] %s1981
          %1984 = dma.vmem_to_hbm [thread:$0]  %s1982, 32, %s1979, %s1967
        $region56: #{tpu_custom_call.1} parent=35 // pred_fallthru
          _
      $region36: #{tpu_custom_call.1} parent=5 // pred_fallthru
        _
      %p1985 = scmp.le.s32.totalorder 2, %s20
      // Predicated region
      $region57: #{tpu_custom_call.1} parent=5 // pred_check
        %p1986 = pneg %p1985
      $region58: #{tpu_custom_call.1} parent=5 // pred_check_branch
        %1988 = sbr.rel (%p1986) target = $region60
      $region59: #{tpu_custom_call.1} parent=5 // pred_region
        %s1989 = ssub.s32 %s20, 2
        // Predicated region
        $region61: #{tpu_custom_call.1} parent=59 // pred_check
          %p1990 = pneg %p143
        $region62: #{tpu_custom_call.1} parent=59 // pred_check_branch
          %1992 = sbr.rel (%p1990) target = $region64
        $region63: #{tpu_custom_call.1} parent=59 // pred_region
          %s1993 = sand.u32 %s128, 1
          %s1994 = scalar_lea.sflag [#allocation4], %s1993
          %s1995 = sand.u32 %s128, 1
          %s1996 = smul.addr %s1995, 2
          %s1997 = scalar_lea.vmem [#allocation10], %s1996
          %1998 = dma.done %s1994, 32
        $region64: #{tpu_custom_call.1} parent=59 // pred_fallthru
          _
      $region60: #{tpu_custom_call.1} parent=5 // pred_fallthru
        _
    $region6: #{tpu_custom_call.1} parent=1 // loop_footer
      %s24 = sadd.s32 1, %s20
    $region7: #{tpu_custom_call.1} parent=1 // loop_footer_branch
      %19 = sbr.rel target = $region3
    $region8: #{tpu_custom_call.1} parent=1 // loop_exit
      _
    %1999 = vsyncpa [#allocation3], 1
    %s2000 = scalar_lea.sflag [#allocation3], 1
    %2001 = vsyncpa %s2000, 1
    %2002 = vsyncpa [#allocation6], 1
    %s2003 = scalar_lea.sflag [#allocation6], 1
    %2004 = vsyncpa %s2003, 1
    %2005 = vsyncpa [#allocation9], 1
    %2006 = vsyncpa [#allocation4], 1
    %s2007 = scalar_lea.sflag [#allocation4], 1
    %2008 = vsyncpa %s2007, 1

</llo_original>
